<compile_context>
chip_gen: v6e
topology: v6e:2x2x1
jax: 0.10.0
libtpu: 0.0.40
codegen_flags: <defaults>
</compile_context>

<pallas_src>
import functools

import jax
import jax.numpy as jnp
from jax.experimental import pallas as pl
from jax.experimental.pallas import tpu as pltpu


MID = 50    # SE bottleneck width (matches the PyTorch module's hard-coded 50)
LANE = 128


# ----------------------------- Pallas kernel ---------------------------------

def sk_block_kernel(xh_ref,                       # (1, Cin, LT+4)   bf16 haloed tile
                    w3_ref, w5_ref,               # (Cout, 3*Cin) / (Cout, 5*Cin) bf16
                    aff_enc_ref,                  # (Cout, 8)        f32 packed affines
                    wl1a_ref, affl1a_ref,         # (MID, Cout) f32, (MID, 2) f32
                    wl1b_ref, affl1b_ref,         # (Cout, MID) f32, (Cout, 2) f32
                    wse_ref, affse_ref,           # (2Cout, Cout) f32, (2Cout, 2) f32
                    out_ref,                      # (1, Cout, LT)    bf16
                    gap_ref,                      # VMEM (Cout, 1)   f32 scratch
                    att_ref,                      # VMEM (Cout, 1)   f32 scratch
                    *, l_true):
    phase = pl.program_id(1)
    lt = pl.program_id(2)
    c_out = out_ref.shape[1]
    l_tile = out_ref.shape[2]

    # ---- build the 5 conv taps in-kernel from the haloed tile (no HBM im2col) ----
    xt = xh_ref[0]                                            # (Cin, LT+4) bf16
    taps = [xt[:, k:k + l_tile] for k in range(5)]            # each (Cin, LT)
    xcol5 = jnp.concatenate(taps, axis=0)                     # (5*Cin, LT)
    xcol3 = jnp.concatenate(taps[1:4], axis=0)                # (3*Cin, LT)

    aff = aff_enc_ref[...]                                    # (Cout, 8)

    # Encoder1: Conv1d k=3 pad=1  ->  one matmul, then folded BN+ReLU twice.
    conv1 = jnp.dot(w3_ref[...], xcol3, preferred_element_type=jnp.float32)
    x1 = jnp.maximum(conv1 * aff[:, 0:1] + aff[:, 1:2], 0.0)
    x1 = jnp.maximum(x1 * aff[:, 2:3] + aff[:, 3:4], 0.0)

    # Encoder2: Conv1d k=5 pad=2.
    conv2 = jnp.dot(w5_ref[...], xcol5, preferred_element_type=jnp.float32)
    x2 = jnp.maximum(conv2 * aff[:, 4:5] + aff[:, 5:6], 0.0)
    x2 = jnp.maximum(x2 * aff[:, 6:7] + aff[:, 7:8], 0.0)

    # ---- phase 0: accumulate the masked GAP partial sums across L tiles ----
    @pl.when(phase == 0)
    def _():
        @pl.when(lt == 0)
        def _():
            gap_ref[...] = jnp.zeros_like(gap_ref)
        col = lt * l_tile + jax.lax.broadcasted_iota(jnp.int32, (c_out, l_tile), 1)
        xs = jnp.where(col < l_true, x1 + x2, 0.0)            # mask padded lanes
        gap_ref[...] += jnp.sum(xs, axis=1, keepdims=True)

    # ---- phase 1, first tile: SE attention from the completed GAP (f32 path) ----
    @pl.when((phase == 1) & (lt == 0))
    def _():
        fgp = gap_ref[...] * (1.0 / l_true)                   # (Cout, 1) f32
        h = jnp.dot(wl1a_ref[...], fgp, preferred_element_type=jnp.float32)
        a = affl1a_ref[...]
        h = jnp.maximum(h * a[:, 0:1] + a[:, 1:2], 0.0)       # (MID, 1)
        xse = jnp.dot(wl1b_ref[...], h, preferred_element_type=jnp.float32)
        a = affl1b_ref[...]
        xse = jnp.maximum(xse * a[:, 0:1] + a[:, 1:2], 0.0)   # (Cout, 1)
        se = jnp.dot(wse_ref[...], xse, preferred_element_type=jnp.float32)
        a = affse_ref[...]
        se = jnp.maximum(se * a[:, 0:1] + a[:, 1:2], 0.0)     # (2*Cout, 1)
        d = se[:c_out, :] - se[c_out:, :]
        # 2-way softmax -> numerically safe sigmoid(se1 - se2) via tanh (EUP).
        att_ref[...] = 0.5 * (jnp.tanh(0.5 * d) + 1.0)

    # ---- phase 1: combine and store (lane-dense bf16 output) ----
    @pl.when(phase == 1)
    def _():
        out_ref[0] = (x2 + att_ref[...] * (x1 - x2)).astype(out_ref.dtype)


# ------------------------------ Parameters -----------------------------------

def _bn_params(key, c):
    k1, k2, k3, k4 = jax.random.split(key, 4)
    gamma = 1.0 + 0.1 * jax.random.normal(k1, (c,), jnp.float32)
    beta = 0.1 * jax.random.normal(k2, (c,), jnp.float32)
    mean = 0.1 * jax.random.normal(k3, (c,), jnp.float32)
    var = 0.5 + 0.5 * jnp.abs(jax.random.normal(k4, (c,), jnp.float32))
    return gamma, beta, mean, var


def _conv_params(key, c_out, c_in, k):
    k1, k2 = jax.random.split(key)
    w = 0.2 * jax.random.normal(k1, (c_out, c_in, k), jnp.float32)
    b = 0.1 * jax.random.normal(k2, (c_out,), jnp.float32)
    return w, b


def init_raw_params(key, c_in, c_out, mid=MID):
    ks = jax.random.split(key, 14)
    p = {}
    p['enc1_conv'] = _conv_params(ks[0], c_out, c_in, 3)
    p['enc1_bn_in'] = _bn_params(ks[1], c_out)
    p['enc1_bn_out'] = _bn_params(ks[2], c_out)
    p['enc2_conv'] = _conv_params(ks[3], c_out, c_in, 5)
    p['enc2_bn_in'] = _bn_params(ks[4], c_out)
    p['enc2_bn_out'] = _bn_params(ks[5], c_out)
    p['l1a_conv'] = _conv_params(ks[6], mid, c_out, 1)
    p['l1a_bn'] = _bn_params(ks[7], mid)
    p['l1b_conv'] = _conv_params(ks[8], c_out, mid, 1)
    p['l1b_bn'] = _bn_params(ks[9], c_out)
    p['se1_conv'] = _conv_params(ks[10], c_out, c_out, 1)
    p['se1_bn'] = _bn_params(ks[11], c_out)
    p['se2_conv'] = _conv_params(ks[12], c_out, c_out, 1)
    p['se2_bn'] = _bn_params(ks[13], c_out)
    return p


def _fold_bn(bn, eps=1e-5):
    gamma, beta, mean, var = bn
    s = gamma / jnp.sqrt(var + eps)
    return s, beta - mean * s


def fold_params(p):
    """Fold conv biases + BN (eval mode) into affines; conv weights as bf16 matrices."""
    f = {}

    # Encoder1 (k=3): weight row layout [tap0(Cin) | tap1(Cin) | tap2(Cin)].
    w, b = p['enc1_conv']                                      # (Cout, Cin, 3)
    c_out = w.shape[0]
    s_a, b_a = _fold_bn(p['enc1_bn_in'])
    s_b, b_b = _fold_bn(p['enc1_bn_out'])
    f['w3'] = jnp.transpose(w, (0, 2, 1)).reshape(c_out, -1).astype(jnp.bfloat16)
    aff1 = [s_a, s_a * b + b_a, s_b, b_b]

    # Encoder2 (k=5).
    w, b = p['enc2_conv']                                      # (Cout, Cin, 5)
    s_a, b_a = _fold_bn(p['enc2_bn_in'])
    s_b, b_b = _fold_bn(p['enc2_bn_out'])
    f['w5'] = jnp.transpose(w, (0, 2, 1)).reshape(c_out, -1).astype(jnp.bfloat16)
    aff2 = [s_a, s_a * b + b_a, s_b, b_b]

    # Packed encoder affines: (Cout, 8) = [s1a, b1a', s1b, b1b, s2a, b2a', s2b, b2b].
    f['aff_enc'] = jnp.stack(aff1 + aff2, axis=1)

    # SE bottleneck 1x1 convs (tiny -> keep f32 for accuracy, negligible cost).
    for name in ('l1a', 'l1b'):
        w, b = p[name + '_conv']
        s, bb = _fold_bn(p[name + '_bn'])
        f['w_' + name] = w[:, :, 0].astype(jnp.float32)
        f['aff_' + name] = jnp.stack([s, s * b + bb], axis=1)

    # Fused SE1/SE2 attention heads: concat along output channels.
    w1, b1 = p['se1_conv']
    w2, b2 = p['se2_conv']
    s1_, bb1 = _fold_bn(p['se1_bn'])
    s2_, bb2 = _fold_bn(p['se2_bn'])
    f['w_se'] = jnp.concatenate([w1[:, :, 0], w2[:, :, 0]], axis=0).astype(jnp.float32)
    f['aff_se'] = jnp.concatenate(
        [jnp.stack([s1_, s1_ * b1 + bb1], axis=1),
         jnp.stack([s2_, s2_ * b2 + bb2], axis=1)], axis=0)    # (2*Cout, 2)
    return f


# ------------------------------ Wrapper ---------------------------------------

def _round_up(x, m):
    return ((x + m - 1) // m) * m


def sk_block_forward(x_ncl, raw_params, *, l_tile_max=2048):
    """x_ncl: (B, C_in, L) float32 in the PyTorch NCL layout.  Returns (B, C_out, L) bf16."""
    B, c_in, L = x_ncl.shape
    f = fold_params(raw_params)
    c_out = f['w5'].shape[0]

    # L tiling: lane-dense (multiple of 128) tiles; largest tile up to l_tile_max.
    l_tile = _round_up(L, LANE) if L <= l_tile_max else l_tile_max
    lp = _round_up(L, l_tile)
    n_l = lp // l_tile

    # bf16 BEFORE padding; left pad 2 (conv 'same'), right pad 2 + lane alignment.
    x_pad = jnp.pad(x_ncl.astype(jnp.bfloat16), ((0, 0), (0, 0), (2, 2 + lp - L)))

    # Haloed tiles (B*nL, Cin, LT+4): only 4 columns duplicated per tile.
    if n_l == 1:
        xh = x_pad                                             # (B, Cin, LT+4)
    else:
        xh = jnp.stack(
            [x_pad[:, :, t * l_tile: t * l_tile + l_tile + 4] for t in range(n_l)],
            axis=1).reshape(B * n_l, c_in, l_tile + 4)

    weights = [f['w3'], f['w5'], f['aff_enc'],
               f['w_l1a'], f['aff_l1a'], f['w_l1b'], f['aff_l1b'],
               f['w_se'], f['aff_se']]

    def _const_spec(shape):
        nd = len(shape)
        return pl.BlockSpec(shape, lambda b, p, l, _nd=nd: (0,) * _nd)

    in_specs = [pl.BlockSpec((1, c_in, l_tile + 4),
                             lambda b, p, l, _n=n_l: (b * _n + l, 0, 0))]
    in_specs += [_const_spec(w.shape) for w in weights]
    # Phase 0 parks the output window on block (b,0,0) (never flushed with garbage);
    # phase 1 walks the L tiles and writes each block exactly once.
    out_spec = pl.BlockSpec((1, c_out, l_tile), lambda b, p, l: (b, 0, p * l))

    # VMEM budget: double-buffered in/out tiles + weights + per-tile temporaries.
    bytes_in = c_in * (l_tile + 4) * 2
    bytes_out = c_out * l_tile * 2
    bytes_w = sum(int(w.size) * w.dtype.itemsize for w in weights)
    bytes_tmp = 16 * c_in * l_tile * 2 + 6 * c_out * l_tile * 4
    est = 2 * 2 * (bytes_in + bytes_out) + 2 * bytes_w + bytes_tmp + (8 << 20)
    try:   # generation-aware cap with headroom (64 MiB physical on v7x, 128 on v5e/v6e)
        cap = int(pltpu.get_tpu_info().vmem_capacity_bytes)
    except Exception:
        cap = 64 << 20
    vmem_limit = int(min(max(est, 32 << 20), cap - (8 << 20)))

    out = pl.pallas_call(
        functools.partial(sk_block_kernel, l_true=L),
        out_shape=jax.ShapeDtypeStruct((B, c_out, lp), jnp.bfloat16),
        grid=(B, 2, n_l),
        in_specs=in_specs,
        out_specs=out_spec,
        scratch_shapes=[pltpu.VMEM((c_out, 1), jnp.float32),   # GAP accumulator
                        pltpu.VMEM((c_out, 1), jnp.float32)],  # attention weights
        compiler_params=pltpu.CompilerParams(
            dimension_semantics=("parallel", "arbitrary", "arbitrary"),
            vmem_limit_bytes=vmem_limit),
    )(xh, *weights)

    return out[:, :, :L]                                       # (B, C_out, L) bf16


# --------------------------- Pure-JAX reference --------------------------------

def _bn_eval(x, bn, eps=1e-5):
    gamma, beta, mean, var = bn
    s = gamma / jnp.sqrt(var + eps)
    return x * s[None, :, None] + (beta - mean * s)[None, :, None]


def _conv1d(x, w, b, pad):
    y = jax.lax.conv_general_dilated(
        x, w, window_strides=(1,), padding=[(pad, pad)],
        dimension_numbers=('NCH', 'OIH', 'NCH'))
    return y + b[None, :, None]


def _one_conv(x, conv, bn, pad):
    w, b = conv
    return jnp.maximum(_bn_eval(_conv1d(x, w, b, pad), bn), 0.0)


def reference_forward(x, p):
    x1 = jnp.maximum(_bn_eval(_one_conv(x, p['enc1_conv'], p['enc1_bn_in'], 1),
                              p['enc1_bn_out']), 0.0)
    x2 = jnp.maximum(_bn_eval(_one_conv(x, p['enc2_conv'], p['enc2_bn_in'], 2),
                              p['enc2_bn_out']), 0.0)
    x_f = x1 + x2
    fgp = jnp.mean(x_f, axis=2, keepdims=True)                 # (B, C, 1)
    h = _one_conv(fgp, p['l1a_conv'], p['l1a_bn'], 0)
    xse = _one_conv(h, p['l1b_conv'], p['l1b_bn'], 0)
    se1 = _one_conv(xse, p['se1_conv'], p['se1_bn'], 0)
    se2 = _one_conv(xse, p['se2_conv'], p['se2_bn'], 0)
    cat = jnp.concatenate([se1, se2], axis=2)                  # (B, C, 2)
    att = jax.nn.softmax(cat, axis=2)
    return att[:, :, 0:1] * x1 + att[:, :, 1:2] * x2


# ----------------------------------- main --------------------------------------

if __name__ == "__main__":
    B, C_IN, C_OUT, L = 2, 4, 8, 16
    key = jax.random.PRNGKey(0)
    kx, kp = jax.random.split(key)
    x = jax.random.normal(kx, (B, C_IN, L), jnp.float32)
    raw_params = init_raw_params(kp, C_IN, C_OUT)

    out = jax.block_until_ready(sk_block_forward(x, raw_params))
    ref = reference_forward(x, raw_params)

    assert out.shape == (B, C_OUT, L), out.shape
    out_f32 = out.astype(jnp.float32)
    # bf16 MXU operands + bf16 output -> loosened tolerance vs the all-f32 reference.
    if not jnp.allclose(out_f32, ref, atol=5e-2, rtol=5e-2):
        max_err = float(jnp.max(jnp.abs(out_f32 - ref)))
        raise AssertionError(f"Pallas kernel mismatch vs reference, max_err={max_err}")

    print("KERNEL_OK")
</pallas_src>

<mosaic_0001>
module attributes {stable_mosaic.version = 11 : i64} {
  func.func @sk_block_kernel(%arg0: i32, %arg1: i32, %arg2: i32, %arg3: memref<1x4x132xbf16, #tpu.memory_space<vmem>>, %arg4: memref<8x12xbf16, #tpu.memory_space<vmem>>, %arg5: memref<8x20xbf16, #tpu.memory_space<vmem>>, %arg6: memref<8x8xf32, #tpu.memory_space<vmem>>, %arg7: memref<50x8xf32, #tpu.memory_space<vmem>>, %arg8: memref<50x2xf32, #tpu.memory_space<vmem>>, %arg9: memref<8x50xf32, #tpu.memory_space<vmem>>, %arg10: memref<8x2xf32, #tpu.memory_space<vmem>>, %arg11: memref<16x8xf32, #tpu.memory_space<vmem>>, %arg12: memref<16x2xf32, #tpu.memory_space<vmem>>, %arg13: memref<1x8x128xbf16, #tpu.memory_space<vmem>>, %arg14: memref<8x1xf32, #tpu.memory_space<vmem>>, %arg15: memref<8x1xf32, #tpu.memory_space<vmem>>) attributes {dimension_semantics = [#tpu.dimension_semantics<parallel>, #tpu.dimension_semantics<arbitrary>, #tpu.dimension_semantics<arbitrary>], iteration_bounds = array<i64: 2, 2, 1>, scalar_prefetch = 0 : i64, scratch_operands = 2 : i64, tpu.core_type = #tpu.core_type<tc>, window_params = [{transform_indices = @transform_0, window_bounds = array<i64: 1, 4, 132>}, {pipeline_mode = #tpu.pipeline_mode<synchronous>, transform_indices = @transform_1, window_bounds = array<i64: 8, 12>}, {pipeline_mode = #tpu.pipeline_mode<synchronous>, transform_indices = @transform_2, window_bounds = array<i64: 8, 20>}, {pipeline_mode = #tpu.pipeline_mode<synchronous>, transform_indices = @transform_3, window_bounds = array<i64: 8, 8>}, {pipeline_mode = #tpu.pipeline_mode<synchronous>, transform_indices = @transform_4, window_bounds = array<i64: 50, 8>}, {pipeline_mode = #tpu.pipeline_mode<synchronous>, transform_indices = @transform_5, window_bounds = array<i64: 50, 2>}, {pipeline_mode = #tpu.pipeline_mode<synchronous>, transform_indices = @transform_6, window_bounds = array<i64: 8, 50>}, {pipeline_mode = #tpu.pipeline_mode<synchronous>, transform_indices = @transform_7, window_bounds = array<i64: 8, 2>}, {pipeline_mode = #tpu.pipeline_mode<synchronous>, transform_indices = @transform_8, window_bounds = array<i64: 16, 8>}, {pipeline_mode = #tpu.pipeline_mode<synchronous>, transform_indices = @transform_9, window_bounds = array<i64: 16, 2>}, {transform_indices = @transform_10, window_bounds = array<i64: 1, 8, 128>}]} {
    %c0 = arith.constant 0 : index
    %c0_0 = arith.constant 0 : index
    %c0_1 = arith.constant 0 : index
    %0 = vector.load %arg3[%c0, %c0_0, %c0_1] : memref<1x4x132xbf16, #tpu.memory_space<vmem>>, vector<1x4x132xbf16>
    %1 = vector.shape_cast %0 : vector<1x4x132xbf16> to vector<4x132xbf16>
    %2 = vector.extract_strided_slice %1 {offsets = [0, 0], sizes = [4, 128], strides = [1, 1]} : vector<4x132xbf16> to vector<4x128xbf16>
    %3 = vector.extract_strided_slice %1 {offsets = [0, 1], sizes = [4, 128], strides = [1, 1]} : vector<4x132xbf16> to vector<4x128xbf16>
    %4 = vector.extract_strided_slice %1 {offsets = [0, 2], sizes = [4, 128], strides = [1, 1]} : vector<4x132xbf16> to vector<4x128xbf16>
    %5 = vector.extract_strided_slice %1 {offsets = [0, 3], sizes = [4, 128], strides = [1, 1]} : vector<4x132xbf16> to vector<4x128xbf16>
    %6 = vector.extract_strided_slice %1 {offsets = [0, 4], sizes = [4, 128], strides = [1, 1]} : vector<4x132xbf16> to vector<4x128xbf16>
    %7 = tpu.concatenate %2, %3, %4, %5, %6 in 0 : vector<4x128xbf16>, vector<4x128xbf16>, vector<4x128xbf16>, vector<4x128xbf16>, vector<4x128xbf16> -> vector<20x128xbf16>
    %8 = tpu.concatenate %3, %4, %5 in 0 : vector<4x128xbf16>, vector<4x128xbf16>, vector<4x128xbf16> -> vector<12x128xbf16>
    %c0_2 = arith.constant 0 : index
    %c0_3 = arith.constant 0 : index
    %9 = vector.load %arg6[%c0_2, %c0_3] : memref<8x8xf32, #tpu.memory_space<vmem>>, vector<8x8xf32>
    %c0_4 = arith.constant 0 : index
    %c0_5 = arith.constant 0 : index
    %10 = vector.load %arg4[%c0_4, %c0_5] : memref<8x12xbf16, #tpu.memory_space<vmem>>, vector<8x12xbf16>
    %cst = arith.constant dense<0.000000e+00> : vector<8x128xf32>
    %11 = tpu.matmul %10, %8, %cst {dimension_numbers = #tpu.dot_dimension_numbers<[1], [0], [0], [1], [0, 0, 1, 1], [], []>} : vector<8x12xbf16>, vector<12x128xbf16>, vector<8x128xf32> -> vector<8x128xf32>
    %12 = vector.extract_strided_slice %9 {offsets = [0, 0], sizes = [8, 1], strides = [1, 1]} : vector<8x8xf32> to vector<8x1xf32>
    %13 = vector.broadcast %12 : vector<8x1xf32> to vector<8x128xf32>
    %14 = arith.mulf %11, %13 : vector<8x128xf32>
    %15 = vector.extract_strided_slice %9 {offsets = [0, 1], sizes = [8, 1], strides = [1, 1]} : vector<8x8xf32> to vector<8x1xf32>
    %16 = vector.broadcast %15 : vector<8x1xf32> to vector<8x128xf32>
    %17 = arith.addf %14, %16 : vector<8x128xf32>
    %cst_6 = arith.constant 0.000000e+00 : f32
    %18 = vector.broadcast %cst_6 : f32 to vector<8x128xf32>
    %19 = arith.maximumf %17, %18 : vector<8x128xf32>
    %20 = vector.extract_strided_slice %9 {offsets = [0, 2], sizes = [8, 1], strides = [1, 1]} : vector<8x8xf32> to vector<8x1xf32>
    %21 = vector.broadcast %20 : vector<8x1xf32> to vector<8x128xf32>
    %22 = arith.mulf %19, %21 : vector<8x128xf32>
    %23 = vector.extract_strided_slice %9 {offsets = [0, 3], sizes = [8, 1], strides = [1, 1]} : vector<8x8xf32> to vector<8x1xf32>
    %24 = vector.broadcast %23 : vector<8x1xf32> to vector<8x128xf32>
    %25 = arith.addf %22, %24 : vector<8x128xf32>
    %cst_7 = arith.constant 0.000000e+00 : f32
    %26 = vector.broadcast %cst_7 : f32 to vector<8x128xf32>
    %27 = arith.maximumf %25, %26 : vector<8x128xf32>
    %c0_8 = arith.constant 0 : index
    %c0_9 = arith.constant 0 : index
    %28 = vector.load %arg5[%c0_8, %c0_9] : memref<8x20xbf16, #tpu.memory_space<vmem>>, vector<8x20xbf16>
    %cst_10 = arith.constant dense<0.000000e+00> : vector<8x128xf32>
    %29 = tpu.matmul %28, %7, %cst_10 {dimension_numbers = #tpu.dot_dimension_numbers<[1], [0], [0], [1], [0, 0, 1, 1], [], []>} : vector<8x20xbf16>, vector<20x128xbf16>, vector<8x128xf32> -> vector<8x128xf32>
    %30 = vector.extract_strided_slice %9 {offsets = [0, 4], sizes = [8, 1], strides = [1, 1]} : vector<8x8xf32> to vector<8x1xf32>
    %31 = vector.broadcast %30 : vector<8x1xf32> to vector<8x128xf32>
    %32 = arith.mulf %29, %31 : vector<8x128xf32>
    %33 = vector.extract_strided_slice %9 {offsets = [0, 5], sizes = [8, 1], strides = [1, 1]} : vector<8x8xf32> to vector<8x1xf32>
    %34 = vector.broadcast %33 : vector<8x1xf32> to vector<8x128xf32>
    %35 = arith.addf %32, %34 : vector<8x128xf32>
    %cst_11 = arith.constant 0.000000e+00 : f32
    %36 = vector.broadcast %cst_11 : f32 to vector<8x128xf32>
    %37 = arith.maximumf %35, %36 : vector<8x128xf32>
    %38 = vector.extract_strided_slice %9 {offsets = [0, 6], sizes = [8, 1], strides = [1, 1]} : vector<8x8xf32> to vector<8x1xf32>
    %39 = vector.broadcast %38 : vector<8x1xf32> to vector<8x128xf32>
    %40 = arith.mulf %37, %39 : vector<8x128xf32>
    %41 = vector.extract_strided_slice %9 {offsets = [0, 7], sizes = [8, 1], strides = [1, 1]} : vector<8x8xf32> to vector<8x1xf32>
    %42 = vector.broadcast %41 : vector<8x1xf32> to vector<8x128xf32>
    %43 = arith.addf %40, %42 : vector<8x128xf32>
    %cst_12 = arith.constant 0.000000e+00 : f32
    %44 = vector.broadcast %cst_12 : f32 to vector<8x128xf32>
    %45 = arith.maximumf %43, %44 : vector<8x128xf32>
    %c0_i32 = arith.constant 0 : i32
    %46 = arith.cmpi eq, %arg1, %c0_i32 : i32
    %47 = arith.extui %46 : i1 to i32
    %c0_i32_13 = arith.constant 0 : i32
    %48 = arith.cmpi ne, %47, %c0_i32_13 : i32
    scf.if %48 {
      %c0_i32_18 = arith.constant 0 : i32
      %57 = arith.cmpi eq, %arg2, %c0_i32_18 : i32
      %58 = arith.extui %57 : i1 to i32
      %c0_i32_19 = arith.constant 0 : i32
      %59 = arith.cmpi ne, %58, %c0_i32_19 : i32
      scf.if %59 {
        %cst_26 = arith.constant 0.000000e+00 : f32
        %74 = vector.broadcast %cst_26 : f32 to vector<8x1xf32>
        %c0_27 = arith.constant 0 : index
        %c0_28 = arith.constant 0 : index
        %75 = vector.load %arg14[%c0_27, %c0_28] : memref<8x1xf32, #tpu.memory_space<vmem>>, vector<8x1xf32>
        tpu.vector_store %arg14[%c0_27, %c0_28], %74 {strides = array<i32>} : memref<8x1xf32, #tpu.memory_space<vmem>>, vector<8x1xf32>,
      } else {
      }
      %c128_i32 = arith.constant 128 : i32
      %60 = arith.muli %arg2, %c128_i32 : i32
      %61 = tpu.iota {dimensions = array<i32: 1>} : vector<8x128xi32>
      %62 = vector.broadcast %60 : i32 to vector<8x128xi32>
      %63 = arith.addi %62, %61 : vector<8x128xi32>
      %c16_i32 = arith.constant 16 : i32
      %64 = vector.broadcast %c16_i32 : i32 to vector<8x128xi32>
      %65 = arith.cmpi slt, %63, %64 : vector<8x128xi32>
      %66 = arith.addf %27, %45 : vector<8x128xf32>
      %cst_20 = arith.constant 0.000000e+00 : f32
      %67 = vector.broadcast %cst_20 : f32 to vector<8x128xf32>
      %68 = arith.select %65, %66, %67 : vector<8x128xi1>, vector<8x128xf32>
      %c0_21 = arith.constant 0 : index
      %c0_22 = arith.constant 0 : index
      %69 = vector.load %arg14[%c0_21, %c0_22] : memref<8x1xf32, #tpu.memory_space<vmem>>, vector<8x1xf32>
      %cst_23 = arith.constant dense<0.000000e+00> : vector<8xf32>
      %70 = vector.multi_reduction <add>, %68, %cst_23 [1] : vector<8x128xf32> to vector<8xf32>
      %71 = vector.shape_cast %70 : vector<8xf32> to vector<8x1xf32>
      %72 = arith.addf %69, %71 : vector<8x1xf32>
      %c0_24 = arith.constant 0 : index
      %c0_25 = arith.constant 0 : index
      %73 = vector.load %arg14[%c0_24, %c0_25] : memref<8x1xf32, #tpu.memory_space<vmem>>, vector<8x1xf32>
      tpu.vector_store %arg14[%c0_24, %c0_25], %72 {strides = array<i32>} : memref<8x1xf32, #tpu.memory_space<vmem>>, vector<8x1xf32>,
    } else {
    }
    %c1_i32 = arith.constant 1 : i32
    %49 = arith.cmpi eq, %arg1, %c1_i32 : i32
    %c0_i32_14 = arith.constant 0 : i32
    %50 = arith.cmpi eq, %arg2, %c0_i32_14 : i32
    %51 = arith.andi %49, %50 : i1
    %52 = arith.extui %51 : i1 to i32
    %c0_i32_15 = arith.constant 0 : i32
    %53 = arith.cmpi ne, %52, %c0_i32_15 : i32
    scf.if %53 {
      %c0_18 = arith.constant 0 : index
      %c0_19 = arith.constant 0 : index
      %57 = vector.load %arg14[%c0_18, %c0_19] : memref<8x1xf32, #tpu.memory_space<vmem>>, vector<8x1xf32>
      %cst_20 = arith.constant 6.250000e-02 : f32
      %58 = vector.broadcast %cst_20 : f32 to vector<8x1xf32>
      %59 = arith.mulf %57, %58 : vector<8x1xf32>
      %c0_21 = arith.constant 0 : index
      %c0_22 = arith.constant 0 : index
      %60 = vector.load %arg7[%c0_21, %c0_22] : memref<50x8xf32, #tpu.memory_space<vmem>>, vector<50x8xf32>
      %cst_23 = arith.constant dense<0.000000e+00> : vector<50x1xf32>
      %61 = tpu.matmul %60, %59, %cst_23 {dimension_numbers = #tpu.dot_dimension_numbers<[1], [0], [0], [1], [0, 0, 1, 1], [], []>} : vector<50x8xf32>, vector<8x1xf32>, vector<50x1xf32> -> vector<50x1xf32>
      %c0_24 = arith.constant 0 : index
      %c0_25 = arith.constant 0 : index
      %62 = vector.load %arg8[%c0_24, %c0_25] : memref<50x2xf32, #tpu.memory_space<vmem>>, vector<50x2xf32>
      %63 = vector.extract_strided_slice %62 {offsets = [0, 0], sizes = [50, 1], strides = [1, 1]} : vector<50x2xf32> to vector<50x1xf32>
      %64 = arith.mulf %61, %63 : vector<50x1xf32>
      %65 = vector.extract_strided_slice %62 {offsets = [0, 1], sizes = [50, 1], strides = [1, 1]} : vector<50x2xf32> to vector<50x1xf32>
      %66 = arith.addf %64, %65 : vector<50x1xf32>
      %cst_26 = arith.constant 0.000000e+00 : f32
      %67 = vector.broadcast %cst_26 : f32 to vector<50x1xf32>
      %68 = arith.maximumf %66, %67 : vector<50x1xf32>
      %c0_27 = arith.constant 0 : index
      %c0_28 = arith.constant 0 : index
      %69 = vector.load %arg9[%c0_27, %c0_28] : memref<8x50xf32, #tpu.memory_space<vmem>>, vector<8x50xf32>
      %cst_29 = arith.constant dense<0.000000e+00> : vector<8x1xf32>
      %70 = tpu.matmul %69, %68, %cst_29 {dimension_numbers = #tpu.dot_dimension_numbers<[1], [0], [0], [1], [0, 0, 1, 1], [], []>} : vector<8x50xf32>, vector<50x1xf32>, vector<8x1xf32> -> vector<8x1xf32>
      %c0_30 = arith.constant 0 : index
      %c0_31 = arith.constant 0 : index
      %71 = vector.load %arg10[%c0_30, %c0_31] : memref<8x2xf32, #tpu.memory_space<vmem>>, vector<8x2xf32>
      %72 = vector.extract_strided_slice %71 {offsets = [0, 0], sizes = [8, 1], strides = [1, 1]} : vector<8x2xf32> to vector<8x1xf32>
      %73 = arith.mulf %70, %72 : vector<8x1xf32>
      %74 = vector.extract_strided_slice %71 {offsets = [0, 1], sizes = [8, 1], strides = [1, 1]} : vector<8x2xf32> to vector<8x1xf32>
      %75 = arith.addf %73, %74 : vector<8x1xf32>
      %cst_32 = arith.constant 0.000000e+00 : f32
      %76 = vector.broadcast %cst_32 : f32 to vector<8x1xf32>
      %77 = arith.maximumf %75, %76 : vector<8x1xf32>
      %c0_33 = arith.constant 0 : index
      %c0_34 = arith.constant 0 : index
      %78 = vector.load %arg11[%c0_33, %c0_34] : memref<16x8xf32, #tpu.memory_space<vmem>>, vector<16x8xf32>
      %cst_35 = arith.constant dense<0.000000e+00> : vector<16x1xf32>
      %79 = tpu.matmul %78, %77, %cst_35 {dimension_numbers = #tpu.dot_dimension_numbers<[1], [0], [0], [1], [0, 0, 1, 1], [], []>} : vector<16x8xf32>, vector<8x1xf32>, vector<16x1xf32> -> vector<16x1xf32>
      %c0_36 = arith.constant 0 : index
      %c0_37 = arith.constant 0 : index
      %80 = vector.load %arg12[%c0_36, %c0_37] : memref<16x2xf32, #tpu.memory_space<vmem>>, vector<16x2xf32>
      %81 = vector.extract_strided_slice %80 {offsets = [0, 0], sizes = [16, 1], strides = [1, 1]} : vector<16x2xf32> to vector<16x1xf32>
      %82 = arith.mulf %79, %81 : vector<16x1xf32>
      %83 = vector.extract_strided_slice %80 {offsets = [0, 1], sizes = [16, 1], strides = [1, 1]} : vector<16x2xf32> to vector<16x1xf32>
      %84 = arith.addf %82, %83 : vector<16x1xf32>
      %cst_38 = arith.constant 0.000000e+00 : f32
      %85 = vector.broadcast %cst_38 : f32 to vector<16x1xf32>
      %86 = arith.maximumf %84, %85 : vector<16x1xf32>
      %87 = vector.extract_strided_slice %86 {offsets = [0, 0], sizes = [8, 1], strides = [1, 1]} : vector<16x1xf32> to vector<8x1xf32>
      %88 = vector.extract_strided_slice %86 {offsets = [8, 0], sizes = [8, 1], strides = [1, 1]} : vector<16x1xf32> to vector<8x1xf32>
      %89 = arith.subf %87, %88 : vector<8x1xf32>
      %cst_39 = arith.constant 5.000000e-01 : f32
      %90 = vector.broadcast %cst_39 : f32 to vector<8x1xf32>
      %91 = arith.mulf %90, %89 : vector<8x1xf32>
      %92 = math.tanh %91 : vector<8x1xf32>
      %cst_40 = arith.constant 1.000000e+00 : f32
      %93 = vector.broadcast %cst_40 : f32 to vector<8x1xf32>
      %94 = arith.addf %92, %93 : vector<8x1xf32>
      %cst_41 = arith.constant 5.000000e-01 : f32
      %95 = vector.broadcast %cst_41 : f32 to vector<8x1xf32>
      %96 = arith.mulf %95, %94 : vector<8x1xf32>
      %c0_42 = arith.constant 0 : index
      %c0_43 = arith.constant 0 : index
      %97 = vector.load %arg15[%c0_42, %c0_43] : memref<8x1xf32, #tpu.memory_space<vmem>>, vector<8x1xf32>
      tpu.vector_store %arg15[%c0_42, %c0_43], %96 {strides = array<i32>} : memref<8x1xf32, #tpu.memory_space<vmem>>, vector<8x1xf32>,
    } else {
    }
    %c1_i32_16 = arith.constant 1 : i32
    %54 = arith.cmpi eq, %arg1, %c1_i32_16 : i32
    %55 = arith.extui %54 : i1 to i32
    %c0_i32_17 = arith.constant 0 : i32
    %56 = arith.cmpi ne, %55, %c0_i32_17 : i32
    scf.if %56 {
      %c0_18 = arith.constant 0 : index
      %c0_19 = arith.constant 0 : index
      %57 = vector.load %arg15[%c0_18, %c0_19] : memref<8x1xf32, #tpu.memory_space<vmem>>, vector<8x1xf32>
      %58 = arith.subf %27, %45 : vector<8x128xf32>
      %59 = vector.broadcast %57 : vector<8x1xf32> to vector<8x128xf32>
      %60 = arith.mulf %59, %58 : vector<8x128xf32>
      %61 = arith.addf %45, %60 : vector<8x128xf32>
      %62 = arith.truncf %61 : vector<8x128xf32> to vector<8x128xbf16>
      %c0_20 = arith.constant 0 : index
      %c0_21 = arith.constant 0 : index
      %c0_22 = arith.constant 0 : index
      %63 = vector.load %arg13[%c0_20, %c0_21, %c0_22] : memref<1x8x128xbf16, #tpu.memory_space<vmem>>, vector<1x8x128xbf16>
      %64 = vector.shape_cast %63 : vector<1x8x128xbf16> to vector<8x128xbf16>
      %65 = vector.shape_cast %62 : vector<8x128xbf16> to vector<1x8x128xbf16>
      tpu.vector_store %arg13[%c0_20, %c0_21, %c0_22], %65 {strides = array<i32>} : memref<1x8x128xbf16, #tpu.memory_space<vmem>>, vector<1x8x128xbf16>,
    } else {
    }
    return
  }
  func.func @transform_0(%arg0: i32, %arg1: i32, %arg2: i32) -> (i32, i32, i32) {
    %c1_i32 = arith.constant 1 : i32
    %0 = arith.muli %arg0, %c1_i32 : i32
    %1 = arith.addi %0, %arg2 : i32
    %c0_i32 = arith.constant 0 : i32
    %c0_i32_0 = arith.constant 0 : i32
    %c0_i32_1 = arith.constant 0 : i32
    return %1, %c0_i32, %c0_i32_0 : i32, i32, i32
  }
  func.func @transform_1(%arg0: i32, %arg1: i32, %arg2: i32) -> (i32, i32) {
    %c0_i32 = arith.constant 0 : i32
    %c0_i32_0 = arith.constant 0 : i32
    %c0_i32_1 = arith.constant 0 : i32
    return %c0_i32, %c0_i32_0 : i32, i32
  }
  func.func @transform_2(%arg0: i32, %arg1: i32, %arg2: i32) -> (i32, i32) {
    %c0_i32 = arith.constant 0 : i32
    %c0_i32_0 = arith.constant 0 : i32
    %c0_i32_1 = arith.constant 0 : i32
    return %c0_i32, %c0_i32_0 : i32, i32
  }
  func.func @transform_3(%arg0: i32, %arg1: i32, %arg2: i32) -> (i32, i32) {
    %c0_i32 = arith.constant 0 : i32
    %c0_i32_0 = arith.constant 0 : i32
    %c0_i32_1 = arith.constant 0 : i32
    return %c0_i32, %c0_i32_0 : i32, i32
  }
  func.func @transform_4(%arg0: i32, %arg1: i32, %arg2: i32) -> (i32, i32) {
    %c0_i32 = arith.constant 0 : i32
    %c0_i32_0 = arith.constant 0 : i32
    %c0_i32_1 = arith.constant 0 : i32
    return %c0_i32, %c0_i32_0 : i32, i32
  }
  func.func @transform_5(%arg0: i32, %arg1: i32, %arg2: i32) -> (i32, i32) {
    %c0_i32 = arith.constant 0 : i32
    %c0_i32_0 = arith.constant 0 : i32
    %c0_i32_1 = arith.constant 0 : i32
    return %c0_i32, %c0_i32_0 : i32, i32
  }
  func.func @transform_6(%arg0: i32, %arg1: i32, %arg2: i32) -> (i32, i32) {
    %c0_i32 = arith.constant 0 : i32
    %c0_i32_0 = arith.constant 0 : i32
    %c0_i32_1 = arith.constant 0 : i32
    return %c0_i32, %c0_i32_0 : i32, i32
  }
  func.func @transform_7(%arg0: i32, %arg1: i32, %arg2: i32) -> (i32, i32) {
    %c0_i32 = arith.constant 0 : i32
    %c0_i32_0 = arith.constant 0 : i32
    %c0_i32_1 = arith.constant 0 : i32
    return %c0_i32, %c0_i32_0 : i32, i32
  }
  func.func @transform_8(%arg0: i32, %arg1: i32, %arg2: i32) -> (i32, i32) {
    %c0_i32 = arith.constant 0 : i32
    %c0_i32_0 = arith.constant 0 : i32
    %c0_i32_1 = arith.constant 0 : i32
    return %c0_i32, %c0_i32_0 : i32, i32
  }
  func.func @transform_9(%arg0: i32, %arg1: i32, %arg2: i32) -> (i32, i32) {
    %c0_i32 = arith.constant 0 : i32
    %c0_i32_0 = arith.constant 0 : i32
    %c0_i32_1 = arith.constant 0 : i32
    return %c0_i32, %c0_i32_0 : i32, i32
  }
  func.func @transform_10(%arg0: i32, %arg1: i32, %arg2: i32) -> (i32, i32, i32) {
    %0 = arith.muli %arg1, %arg2 : i32
    %c0_i32 = arith.constant 0 : i32
    %c0_i32_0 = arith.constant 0 : i32
    return %arg0, %c0_i32, %0 : i32, i32, i32
  }
}

</mosaic_0001>

<llo_original>
// kernel: tpu_custom_call.1
$region0: #{tpu_custom_call.1}
  #allocation0 [shape = 'u32[]', space=smem, size = 0x4, offset = 0x4, fixed_abs, tag = 'smem constant byte address 0x4 - core index']
  #allocation1 [shape = 'u32[144,128]{1,0:T(1,128)}', space=vmem, size = 0x12000, scoped, tag = 'internal scratch']
  #allocation2 [shape = 'f32[8,1]{1,0:T(8,128)}', space=vmem, size = 0x1000, scoped, tag = 'scratch operand']
  #allocation3 [shape = 'f32[8,1]{1,0:T(8,128)}', space=vmem, size = 0x1000, scoped, tag = 'scratch operand']
  %s0 = inlined_call_operand.vmem [shape: bf16[2,4,132], index: 0, kind: input, shape index: {}]
  %s1 = inlined_call_operand.vmem [shape: bf16[8,12], index: 1, kind: input, shape index: {}]
  %s2 = inlined_call_operand.vmem [shape: bf16[8,20], index: 2, kind: input, shape index: {}]
  %s3 = inlined_call_operand.vmem [shape: f32[8,8], index: 3, kind: input, shape index: {}]
  %s4 = inlined_call_operand.vmem [shape: f32[50,8], index: 4, kind: input, shape index: {}]
  %s5 = inlined_call_operand.vmem [shape: f32[50,2], index: 5, kind: input, shape index: {}]
  %s6 = inlined_call_operand.vmem [shape: f32[8,50], index: 6, kind: input, shape index: {}]
  %s7 = inlined_call_operand.vmem [shape: f32[8,2], index: 7, kind: input, shape index: {}]
  %s8 = inlined_call_operand.vmem [shape: f32[16,8], index: 8, kind: input, shape index: {}]
  %s9 = inlined_call_operand.vmem [shape: f32[16,2], index: 9, kind: input, shape index: {}]
  %s10 = inlined_call_operand.hbm [shape: bf16[2,8,128], index: 10, kind: output, shape index: {}]
  %s11 = sld [smem:[#allocation0]]
  $region89: #{tpu_custom_call.1} parent=0
    _
  %s13 = ssub.s32 1, %s11
  %s14 = scalar_select 0, %s13, %s11
  $region1: #{tpu_custom_call.1} parent=0
    #allocation4 [shape = 'u8[4096]{0}', space=vmem, size = 0x1000, scoped, tag = 'output window, operand 0']
    #allocation5 [shape = 's32[2]{0}', space=sflag, size = 0x8, scoped, tag = 'scoped memory for tpu_custom_call.1']
    %15 = vsyncpa [#allocation5], 0
    %s16 = scalar_lea.sflag [#allocation5], 1
    %17 = vsyncpa %s16, 0
    loop: start=0, step=1, limit=6
    $region2: #{tpu_custom_call.1} parent=1 // loop_pre_header
      _
    $region3: #{tpu_custom_call.1} parent=1 // loop_header
      %s19 = sphi 0, %s23
      %p20 = scmp.ge.s32.totalorder %s19, 6
      %s26 = sphi 0, %s45
      %s27 = sphi 0, %s41
      %s28 = sphi 0, %s37
      %s29 = sphi 0, %s26
      %s30 = sphi 0, %s27
      %s31 = sphi 0, %s28
      %s32 = sphi 0, %s29
      %s33 = sphi 0, %s30
      %s34 = sphi 0, %s31
      %s50 = sphi 0, %s52
      %s53 = sphi 0, %s50
      %s54 = sphi 0, %s53
      %s70 = sphi 0, %s54
      %s74 = sphi 0, %s74
      %s76 = sphi 0, %s74
      %s77 = sphi 0, %s76
      %s91 = sphi 0, %s77
      %s95 = sphi 0, %s95
      %s97 = sphi 0, %s95
      %s98 = sphi 0, %s97
      %s112 = sphi 0, %s98
      %s116 = sphi 0, %s116
      %s118 = sphi 0, %s116
      %s119 = sphi 0, %s118
      %s133 = sphi 0, %s119
      %s137 = sphi 0, %s137
      %s139 = sphi 0, %s137
      %s140 = sphi 0, %s139
      %s154 = sphi 0, %s140
      %s158 = sphi 0, %s158
      %s160 = sphi 0, %s158
      %s161 = sphi 0, %s160
      %s175 = sphi 0, %s161
      %s179 = sphi 0, %s179
      %s181 = sphi 0, %s179
      %s182 = sphi 0, %s181
      %s196 = sphi 0, %s182
      %s200 = sphi 0, %s200
      %s202 = sphi 0, %s200
      %s203 = sphi 0, %s202
      %s217 = sphi 0, %s203
      %s221 = sphi 0, %s221
      %s223 = sphi 0, %s221
      %s224 = sphi 0, %s223
      %s238 = sphi 0, %s224
      %s242 = sphi 0, %s242
      %s244 = sphi 0, %s242
      %s245 = sphi 0, %s244
      %s259 = sphi 0, %s245
      %s269 = sphi 0, %s271
      %s272 = sphi 0, %s269
      %s273 = sphi 0, %s272
      %s289 = sphi 0, %s273
    $region4: #{tpu_custom_call.1} parent=1 // loop_header_branch
      %22 = sbr.rel (%p20) target = $region8
    $region5: #{tpu_custom_call.1} parent=1 // loop_body
      %s24 = ssub.s32 %s19, 1
      %s25 = ssub.s32 %s19, 2
      %s35 = sadd.s32 1, %s28
      %p36 = scmp.ge.s32.totalorder %s35, 1
      %s37 = scalar_select %p36, 0, %s35
      %s38 = sadd.s32 1, %s27
      %s39 = scalar_select %p36, %s38, %s27
      %p40 = scmp.ge.s32.totalorder %s39, 2
      %s41 = scalar_select %p40, 0, %s39
      %s42 = sadd.s32 1, %s26
      %s43 = scalar_select %p40, %s42, %s26
      %p44 = scmp.ge.s32.totalorder %s43, 2
      %s45 = scalar_select %p44, 0, %s43
      %s46 = sadd.s32 %s26, %s28
      %s47 = sadd.s32 %s45, %s37
      %s48 = ssub.s32 %s46, %s47
      %p49 = scmp.eq.s32.totalorder %s48, 0
      %s51 = sadd.s32 %s50, 1
      %s52 = scalar_select %p49, %s50, %s51
      %p55 = pneg %p49
      %p56 = scmp.eq.s32.totalorder %s19, 3
      %p57 = por %p55, %p56
      %p58 = scmp.ne.s32.totalorder %s50, %s53
      %p59 = scmp.eq.s32.totalorder %s19, 0
      %p60 = por %p58, %p59
      %p61 = scmp.ne.s32.totalorder %s50, %s53
      %p62 = scmp.eq.s32.totalorder %s24, 3
      %p63 = por %p61, %p62
      %p64 = scmp.ne.s32.totalorder %s53, %s54
      %p65 = scmp.eq.s32.totalorder %s24, 0
      %p66 = por %p64, %p65
      %p67 = scmp.ne.s32.totalorder %s53, %s54
      %p68 = scmp.eq.s32.totalorder %s25, 3
      %p69 = por %p67, %p68
      %p71 = scmp.ne.s32.totalorder %s54, %s70
      %p72 = scmp.eq.s32.totalorder %s25, 0
      %p73 = por %p71, %p72
      %s75 = sadd.s32 %s74, 1
      %p78 = scmp.eq.s32.totalorder %s19, 3
      %p79 = scmp.ne.s32.totalorder %s74, %s76
      %p80 = scmp.eq.s32.totalorder %s19, 0
      %p81 = por %p79, %p80
      %p82 = scmp.ne.s32.totalorder %s74, %s76
      %p83 = scmp.eq.s32.totalorder %s24, 3
      %p84 = por %p82, %p83
      %p85 = scmp.ne.s32.totalorder %s76, %s77
      %p86 = scmp.eq.s32.totalorder %s24, 0
      %p87 = por %p85, %p86
      %p88 = scmp.ne.s32.totalorder %s76, %s77
      %p89 = scmp.eq.s32.totalorder %s25, 3
      %p90 = por %p88, %p89
      %p92 = scmp.ne.s32.totalorder %s77, %s91
      %p93 = scmp.eq.s32.totalorder %s25, 0
      %p94 = por %p92, %p93
      %s96 = sadd.s32 %s95, 1
      %p99 = scmp.eq.s32.totalorder %s19, 3
      %p100 = scmp.ne.s32.totalorder %s95, %s97
      %p101 = scmp.eq.s32.totalorder %s19, 0
      %p102 = por %p100, %p101
      %p103 = scmp.ne.s32.totalorder %s95, %s97
      %p104 = scmp.eq.s32.totalorder %s24, 3
      %p105 = por %p103, %p104
      %p106 = scmp.ne.s32.totalorder %s97, %s98
      %p107 = scmp.eq.s32.totalorder %s24, 0
      %p108 = por %p106, %p107
      %p109 = scmp.ne.s32.totalorder %s97, %s98
      %p110 = scmp.eq.s32.totalorder %s25, 3
      %p111 = por %p109, %p110
      %p113 = scmp.ne.s32.totalorder %s98, %s112
      %p114 = scmp.eq.s32.totalorder %s25, 0
      %p115 = por %p113, %p114
      %s117 = sadd.s32 %s116, 1
      %p120 = scmp.eq.s32.totalorder %s19, 3
      %p121 = scmp.ne.s32.totalorder %s116, %s118
      %p122 = scmp.eq.s32.totalorder %s19, 0
      %p123 = por %p121, %p122
      %p124 = scmp.ne.s32.totalorder %s116, %s118
      %p125 = scmp.eq.s32.totalorder %s24, 3
      %p126 = por %p124, %p125
      %p127 = scmp.ne.s32.totalorder %s118, %s119
      %p128 = scmp.eq.s32.totalorder %s24, 0
      %p129 = por %p127, %p128
      %p130 = scmp.ne.s32.totalorder %s118, %s119
      %p131 = scmp.eq.s32.totalorder %s25, 3
      %p132 = por %p130, %p131
      %p134 = scmp.ne.s32.totalorder %s119, %s133
      %p135 = scmp.eq.s32.totalorder %s25, 0
      %p136 = por %p134, %p135
      %s138 = sadd.s32 %s137, 1
      %p141 = scmp.eq.s32.totalorder %s19, 3
      %p142 = scmp.ne.s32.totalorder %s137, %s139
      %p143 = scmp.eq.s32.totalorder %s19, 0
      %p144 = por %p142, %p143
      %p145 = scmp.ne.s32.totalorder %s137, %s139
      %p146 = scmp.eq.s32.totalorder %s24, 3
      %p147 = por %p145, %p146
      %p148 = scmp.ne.s32.totalorder %s139, %s140
      %p149 = scmp.eq.s32.totalorder %s24, 0
      %p150 = por %p148, %p149
      %p151 = scmp.ne.s32.totalorder %s139, %s140
      %p152 = scmp.eq.s32.totalorder %s25, 3
      %p153 = por %p151, %p152
      %p155 = scmp.ne.s32.totalorder %s140, %s154
      %p156 = scmp.eq.s32.totalorder %s25, 0
      %p157 = por %p155, %p156
      %s159 = sadd.s32 %s158, 1
      %p162 = scmp.eq.s32.totalorder %s19, 3
      %p163 = scmp.ne.s32.totalorder %s158, %s160
      %p164 = scmp.eq.s32.totalorder %s19, 0
      %p165 = por %p163, %p164
      %p166 = scmp.ne.s32.totalorder %s158, %s160
      %p167 = scmp.eq.s32.totalorder %s24, 3
      %p168 = por %p166, %p167
      %p169 = scmp.ne.s32.totalorder %s160, %s161
      %p170 = scmp.eq.s32.totalorder %s24, 0
      %p171 = por %p169, %p170
      %p172 = scmp.ne.s32.totalorder %s160, %s161
      %p173 = scmp.eq.s32.totalorder %s25, 3
      %p174 = por %p172, %p173
      %p176 = scmp.ne.s32.totalorder %s161, %s175
      %p177 = scmp.eq.s32.totalorder %s25, 0
      %p178 = por %p176, %p177
      %s180 = sadd.s32 %s179, 1
      %p183 = scmp.eq.s32.totalorder %s19, 3
      %p184 = scmp.ne.s32.totalorder %s179, %s181
      %p185 = scmp.eq.s32.totalorder %s19, 0
      %p186 = por %p184, %p185
      %p187 = scmp.ne.s32.totalorder %s179, %s181
      %p188 = scmp.eq.s32.totalorder %s24, 3
      %p189 = por %p187, %p188
      %p190 = scmp.ne.s32.totalorder %s181, %s182
      %p191 = scmp.eq.s32.totalorder %s24, 0
      %p192 = por %p190, %p191
      %p193 = scmp.ne.s32.totalorder %s181, %s182
      %p194 = scmp.eq.s32.totalorder %s25, 3
      %p195 = por %p193, %p194
      %p197 = scmp.ne.s32.totalorder %s182, %s196
      %p198 = scmp.eq.s32.totalorder %s25, 0
      %p199 = por %p197, %p198
      %s201 = sadd.s32 %s200, 1
      %p204 = scmp.eq.s32.totalorder %s19, 3
      %p205 = scmp.ne.s32.totalorder %s200, %s202
      %p206 = scmp.eq.s32.totalorder %s19, 0
      %p207 = por %p205, %p206
      %p208 = scmp.ne.s32.totalorder %s200, %s202
      %p209 = scmp.eq.s32.totalorder %s24, 3
      %p210 = por %p208, %p209
      %p211 = scmp.ne.s32.totalorder %s202, %s203
      %p212 = scmp.eq.s32.totalorder %s24, 0
      %p213 = por %p211, %p212
      %p214 = scmp.ne.s32.totalorder %s202, %s203
      %p215 = scmp.eq.s32.totalorder %s25, 3
      %p216 = por %p214, %p215
      %p218 = scmp.ne.s32.totalorder %s203, %s217
      %p219 = scmp.eq.s32.totalorder %s25, 0
      %p220 = por %p218, %p219
      %s222 = sadd.s32 %s221, 1
      %p225 = scmp.eq.s32.totalorder %s19, 3
      %p226 = scmp.ne.s32.totalorder %s221, %s223
      %p227 = scmp.eq.s32.totalorder %s19, 0
      %p228 = por %p226, %p227
      %p229 = scmp.ne.s32.totalorder %s221, %s223
      %p230 = scmp.eq.s32.totalorder %s24, 3
      %p231 = por %p229, %p230
      %p232 = scmp.ne.s32.totalorder %s223, %s224
      %p233 = scmp.eq.s32.totalorder %s24, 0
      %p234 = por %p232, %p233
      %p235 = scmp.ne.s32.totalorder %s223, %s224
      %p236 = scmp.eq.s32.totalorder %s25, 3
      %p237 = por %p235, %p236
      %p239 = scmp.ne.s32.totalorder %s224, %s238
      %p240 = scmp.eq.s32.totalorder %s25, 0
      %p241 = por %p239, %p240
      %s243 = sadd.s32 %s242, 1
      %p246 = scmp.eq.s32.totalorder %s19, 3
      %p247 = scmp.ne.s32.totalorder %s242, %s244
      %p248 = scmp.eq.s32.totalorder %s19, 0
      %p249 = por %p247, %p248
      %p250 = scmp.ne.s32.totalorder %s242, %s244
      %p251 = scmp.eq.s32.totalorder %s24, 3
      %p252 = por %p250, %p251
      %p253 = scmp.ne.s32.totalorder %s244, %s245
      %p254 = scmp.eq.s32.totalorder %s24, 0
      %p255 = por %p253, %p254
      %p256 = scmp.ne.s32.totalorder %s244, %s245
      %p257 = scmp.eq.s32.totalorder %s25, 3
      %p258 = por %p256, %p257
      %p260 = scmp.ne.s32.totalorder %s245, %s259
      %p261 = scmp.eq.s32.totalorder %s25, 0
      %p262 = por %p260, %p261
      %s263 = smul.u32 %s27, %s28
      %s264 = smul.u32 %s41, %s37
      %s265 = ssub.s32 %s26, %s45
      %s266 = ssub.s32 %s263, %s264
      %s267 = sor.u32 %s265, %s266
      %p268 = scmp.eq.s32.totalorder %s267, 0
      %s270 = sadd.s32 %s269, 1
      %s271 = scalar_select %p268, %s269, %s270
      %p274 = pneg %p268
      %p275 = scmp.eq.s32.totalorder %s19, 3
      %p276 = por %p274, %p275
      %p277 = scmp.ne.s32.totalorder %s269, %s272
      %p278 = scmp.eq.s32.totalorder %s19, 0
      %p279 = por %p277, %p278
      %p280 = scmp.ne.s32.totalorder %s269, %s272
      %p281 = scmp.eq.s32.totalorder %s24, 3
      %p282 = por %p280, %p281
      %p283 = scmp.ne.s32.totalorder %s272, %s273
      %p284 = scmp.eq.s32.totalorder %s24, 0
      %p285 = por %p283, %p284
      %p286 = scmp.ne.s32.totalorder %s272, %s273
      %p287 = scmp.eq.s32.totalorder %s25, 3
      %p288 = por %p286, %p287
      %p290 = scmp.ne.s32.totalorder %s273, %s289
      %p291 = scmp.eq.s32.totalorder %s25, 0
      %p292 = por %p290, %p291
      %p293 = scmp.le.s32.totalorder 1, %s19
      %p294 = scmp.lt.s32.totalorder %s19, 5
      %p295 = pnand %p293, %p294
      %p296 = pneg %p295
      // Predicated region
      $region9: #{tpu_custom_call.1} parent=5 // pred_check
        _
      $region10: #{tpu_custom_call.1} parent=5 // pred_check_branch
        %298 = sbr.rel (%p295) target = $region12
      $region11: #{tpu_custom_call.1} parent=5 // pred_region
        %s299 = ssub.s32 %s19, 1
        // Predicated region
        $region13: #{tpu_custom_call.1} parent=11 // pred_check
          %p300 = pneg %p87
        $region14: #{tpu_custom_call.1} parent=11 // pred_check_branch
          %302 = sbr.rel (%p300) target = $region16
        $region15: #{tpu_custom_call.1} parent=11 // pred_region
          _
        $region16: #{tpu_custom_call.1} parent=11 // pred_fallthru
          _
        // Predicated region
        $region17: #{tpu_custom_call.1} parent=11 // pred_check
          %p303 = pneg %p108
        $region18: #{tpu_custom_call.1} parent=11 // pred_check_branch
          %305 = sbr.rel (%p303) target = $region20
        $region19: #{tpu_custom_call.1} parent=11 // pred_region
          _
        $region20: #{tpu_custom_call.1} parent=11 // pred_fallthru
          _
        // Predicated region
        $region21: #{tpu_custom_call.1} parent=11 // pred_check
          %p306 = pneg %p129
        $region22: #{tpu_custom_call.1} parent=11 // pred_check_branch
          %308 = sbr.rel (%p306) target = $region24
        $region23: #{tpu_custom_call.1} parent=11 // pred_region
          _
        $region24: #{tpu_custom_call.1} parent=11 // pred_fallthru
          _
        // Predicated region
        $region25: #{tpu_custom_call.1} parent=11 // pred_check
          %p309 = pneg %p150
        $region26: #{tpu_custom_call.1} parent=11 // pred_check_branch
          %311 = sbr.rel (%p309) target = $region28
        $region27: #{tpu_custom_call.1} parent=11 // pred_region
          _
        $region28: #{tpu_custom_call.1} parent=11 // pred_fallthru
          _
        // Predicated region
        $region29: #{tpu_custom_call.1} parent=11 // pred_check
          %p312 = pneg %p171
        $region30: #{tpu_custom_call.1} parent=11 // pred_check_branch
          %314 = sbr.rel (%p312) target = $region32
        $region31: #{tpu_custom_call.1} parent=11 // pred_region
          _
        $region32: #{tpu_custom_call.1} parent=11 // pred_fallthru
          _
        // Predicated region
        $region33: #{tpu_custom_call.1} parent=11 // pred_check
          %p315 = pneg %p192
        $region34: #{tpu_custom_call.1} parent=11 // pred_check_branch
          %317 = sbr.rel (%p315) target = $region36
        $region35: #{tpu_custom_call.1} parent=11 // pred_region
          _
        $region36: #{tpu_custom_call.1} parent=11 // pred_fallthru
          _
        // Predicated region
        $region37: #{tpu_custom_call.1} parent=11 // pred_check
          %p318 = pneg %p213
        $region38: #{tpu_custom_call.1} parent=11 // pred_check_branch
          %320 = sbr.rel (%p318) target = $region40
        $region39: #{tpu_custom_call.1} parent=11 // pred_region
          _
        $region40: #{tpu_custom_call.1} parent=11 // pred_fallthru
          _
        // Predicated region
        $region41: #{tpu_custom_call.1} parent=11 // pred_check
          %p321 = pneg %p234
        $region42: #{tpu_custom_call.1} parent=11 // pred_check_branch
          %323 = sbr.rel (%p321) target = $region44
        $region43: #{tpu_custom_call.1} parent=11 // pred_region
          _
        $region44: #{tpu_custom_call.1} parent=11 // pred_fallthru
          _
        // Predicated region
        $region45: #{tpu_custom_call.1} parent=11 // pred_check
          %p324 = pneg %p255
        $region46: #{tpu_custom_call.1} parent=11 // pred_check_branch
          %326 = sbr.rel (%p324) target = $region48
        $region47: #{tpu_custom_call.1} parent=11 // pred_region
          _
        $region48: #{tpu_custom_call.1} parent=11 // pred_fallthru
          _
      $region12: #{tpu_custom_call.1} parent=5 // pred_fallthru
        _
      %p327 = scmp.lt.s32.totalorder %s19, 4
      // Predicated region
      $region49: #{tpu_custom_call.1} parent=5 // pred_check
        %p328 = pneg %p327
      $region50: #{tpu_custom_call.1} parent=5 // pred_check_branch
        %330 = sbr.rel (%p328) target = $region52
      $region51: #{tpu_custom_call.1} parent=5 // pred_region
        // Predicated region
        $region53: #{tpu_custom_call.1} parent=51 // pred_check
          %p331 = pneg %p60
        $region54: #{tpu_custom_call.1} parent=51 // pred_check_branch
          %333 = sbr.rel (%p331) target = $region56
        $region55: #{tpu_custom_call.1} parent=51 // pred_region
          %s334 = sadd.s32 %s26, %s28
          %p335 = scmp.lt.s32.totalorder %s334, 1
          %s336 = scalar_select %p335, %s334, 1
          %s337 = smul.addr %s336, 2
          %s338 = smul.addr %s337, 2
          %s339 = scalar_lea.vmem %s0, %s338
          %s340 = sadd.s32 %s26, %s28
        $region56: #{tpu_custom_call.1} parent=51 // pred_fallthru
          _
      $region52: #{tpu_custom_call.1} parent=5 // pred_fallthru
        _
      %p341 = scmp.le.s32.totalorder 1, %s19
      %p342 = scmp.lt.s32.totalorder %s19, 5
      %p343 = pnand %p341, %p342
      %p344 = pneg %p343
      // Predicated region
      $region57: #{tpu_custom_call.1} parent=5 // pred_check
        _
      $region58: #{tpu_custom_call.1} parent=5 // pred_check_branch
        %346 = sbr.rel (%p343) target = $region60
      $region59: #{tpu_custom_call.1} parent=5 // pred_region
        %s347 = ssub.s32 %s19, 1
        %s348 = sadd.s32 %s29, %s31
        %p349 = scmp.lt.s32.totalorder %s348, 1
        %s350 = scalar_select %p349, %s348, 1
        %s351 = smul.addr %s350, 2
        %s352 = smul.addr %s351, 2
        %s353 = scalar_lea.vmem %s0, %s352
        %p354 = pneg %p66
        %p355 = pneg %p63
        %p356 = pneg %p87
        %p357 = pneg %p84
        %p358 = pneg %p108
        %p359 = pneg %p105
        %p360 = pneg %p129
        %p361 = pneg %p126
        %p362 = pneg %p150
        %p363 = pneg %p147
        %p364 = pneg %p171
        %p365 = pneg %p168
        %p366 = pneg %p192
        %p367 = pneg %p189
        %p368 = pneg %p213
        %p369 = pneg %p210
        %p370 = pneg %p234
        %p371 = pneg %p231
        %p372 = pneg %p255
        %p373 = pneg %p252
        %p374 = pneg %p285
        %p375 = pneg %p282
        %s376 = sand.u32 %s272, 1
        %s377 = scalar_lea.sflag [#allocation5], %s376
        %s378 = sand.u32 %s272, 1
        %s379 = smul.addr %s378, 4
        %s380 = scalar_lea.vmem [#allocation4], %s379
        %s381 = sadd.s32 %s29, %s31
        %p382 = scmp.lt.s32.totalorder %s381, 1
        %s383 = scalar_select %p382, %s381, 1
        %s384 = smul.addr %s383, 2
        %s385 = smul.addr %s384, 2
        %s386 = scalar_lea.vmem %s0, %s385
        %s387 = sadd.s32 %s29, %s31
        %s388 = smul.u32 %s30, %s31
        %v390 = vld [vmem:[%s386] sm:$0xf]
        %v392 = vcombine.low %v390, %v390
        %v394 = vunpack.c.l.s4 1983009808
        %v395 = vunpack.c.0.s8 %v394
        %v396 = vlaneseq
        %v397 = vshrl.u32 %v396, 7
        %v398 = vsub.s32 %v395, %v397
        %v399 = vrot.slane %v392, %v398
        %v401 = vunpack.c.l.s4 1983009808
        %v402 = vunpack.c.0.s8 %v401
        %v403 = vlaneseq
        %v404 = vshrl.u32 %v403, 7
        %v405 = vsub.s32 %v402, %v404
        %v406 = vrot.slane %v390, %v405
        %v407 = vcombine.high %v399, %v399
        %408 = vrot.lane.b32.xlu0 %v399, 127
        %v409 = vpop.permute.xlu0 %408
        %410 = vrot.lane.b32.xlu0 %v407, 127
        %v411 = vpop.permute.xlu0 %410
        %vm412 = vcmask 1039360
        %v413 = vsel %vm412, %v409, %v411
        %v414 = vcombine.low %v406, %v406
        %415 = vrot.lane.b32.xlu0 %v414, 126
        %v416 = vpop.permute.xlu0 %415
        %417 = vrot.lane.b32.xlu0 %v406, 126
        %v418 = vpop.permute.xlu0 %417
        %vm419 = vcmask 1031168
        %v420 = vsel %vm419, %v416, %v418
        %v421 = vcombine.low %v399, %v399
        %422 = vrot.lane.b32.xlu0 %v421, 125
        %v423 = vpop.permute.xlu0 %422
        %424 = vrot.lane.b32.xlu0 %v399, 125
        %v425 = vpop.permute.xlu0 %424
        %vm426 = vcmask 1022976
        %v427 = vsel %vm426, %v423, %v425
        %v428 = vcombine.high %v406, %v406
        %429 = vrot.lane.b32.xlu0 %v406, 124
        %v430 = vpop.permute.xlu0 %429
        %431 = vrot.lane.b32.xlu0 %v428, 124
        %v432 = vpop.permute.xlu0 %431
        %vm433 = vcmask 1014784
        %v434 = vsel %vm433, %v430, %v432
        %vm435 = vcmask 1041408
        %v438 = vsel %vm435, %v390, %v413
        %vm439 = vcmask 1043456
        %v441 = vsel %vm439, %v438, %v420
        %vm442 = vcmask 1045504
        %v444 = vsel %vm442, %v441, %v427
        %v447 = vsel %vm435, %v406, %v413
        %v450 = vsel %vm435, %v428, %v411
        %v451 = vsel %vm439, %v447, %v420
        %v453 = vsel %vm439, %v450, %v418
        %v454 = vld [vmem:[%s3] sm:$0xff]
        %v455 = vld [vmem:[%s1] sm:$0xf]
        %458 = vrot.lane.b32.xlu0 %v451, 127
        %v459 = vpop.permute.xlu0 %458
        %460 = vrot.lane.b32.xlu0 %v453, 127
        %v461 = vpop.permute.xlu0 %460
        %v462 = vsel %vm412, %v459, %v461
        %vm463 = vcmask 97280
        %v465 = vsel %vm463, %v455, 0
        %v468 = vsel %vm442, %v462, 0
        %470 = vmatprep.subr.bf16.mxu0 0
        %471 = vmatpush1.bf16.msra.mxu0 0
        %472 = vmatprep.subr.bf16.mxu0 0
        %473 = vmatpush1.bf16.msra.mxu0 0
        %474 = vmatprep.subr.bf16.mxu0 0
        %475 = vmatpush1.bf16.msra.mxu0 0
        %476 = vmatprep.subr.bf16.mxu0 0
        %477 = vmatpush1.bf16.msra.mxu0 0
        %478 = vmatprep.subr.bf16.mxu0 0
        %479 = vmatpush1.bf16.msra.mxu0 0
        %480 = vmatprep.subr.bf16.mxu0 0
        %481 = vmatpush1.bf16.msra.mxu0 0
        %482 = vmatprep.subr.bf16.mxu0 0
        %483 = vmatpush1.bf16.msra.mxu0 0
        %484 = vmatprep.subr.bf16.mxu0 0
        %485 = vmatpush1.bf16.msra.mxu0 %v468
        %486 = vmatprep.subr.bf16.mxu0 0
        %487 = vmatpush2.bf16.msra.mxu0 0
        %488 = vmatprep.subr.bf16.mxu0 0
        %489 = vmatpush2.bf16.msra.mxu0 0
        %490 = vmatprep.subr.bf16.mxu0 0
        %491 = vmatpush2.bf16.msra.mxu0 0
        %492 = vmatprep.subr.bf16.mxu0 0
        %493 = vmatpush2.bf16.msra.mxu0 0
        %494 = vmatprep.subr.bf16.mxu0 0
        %495 = vmatpush2.bf16.msra.mxu0 0
        %496 = vmatprep.subr.bf16.mxu0 0
        %497 = vmatpush2.bf16.msra.mxu0 0
        %498 = vmatprep.subr.bf16.mxu0 0
        %499 = vmatpush2.bf16.msra.mxu0 0
        %500 = vmatprep.subr.bf16.mxu0 0
        %501 = vmatpush2.bf16.msra.mxu0 0
        %502 = vmatprep.mubr.bf16.mxu0 0
        %503 = vmatmul.mubr.bf16.gmra.mxu0 %v465
        %v504 = vpop.f32.mrf.mxu0
        %v505 = vadd.f32 0.0, %v504
        %v506 = vpop.f32.mrf.mxu0
        %v507 = vpop.f32.mrf.mxu0
        %v508 = vpop.f32.mrf.mxu0
        %509 = vdwg.mxu0
        %511 = vset.pattern.permute.xlu0 0
        %512 = vperm.xlu0 %511, %v454
        %v513 = vpop.permute.xlu0 %512
        %v515 = vmul.f32 %v505, %v513
        %516 = vset.pattern.permute.xlu0 1
        %517 = vperm.xlu0 %516, %v454
        %v518 = vpop.permute.xlu0 %517
        %v520 = vadd.f32 %v515, %v518
        %v521 = vmax.f32 %v520, 0.0
        %522 = vset.pattern.permute.xlu0 2
        %523 = vperm.xlu0 %522, %v454
        %v524 = vpop.permute.xlu0 %523
        %v526 = vmul.f32 %v521, %v524
        %527 = vset.pattern.permute.xlu0 3
        %528 = vperm.xlu0 %527, %v454
        %v529 = vpop.permute.xlu0 %528
        %v531 = vadd.f32 %v526, %v529
        %v532 = vmax.f32 %v531, 0.0
        %v533 = vld [vmem:[%s2] sm:$0xf]
        %vm534 = vcmask 162816
        %v536 = vsel %vm534, %v533, 0
        %v539 = vsel %vm435, %v434, 0
        %541 = vmatprep.subr.bf16.mxu0 0
        %542 = vmatpush1.bf16.msra.mxu0 0
        %543 = vmatprep.subr.bf16.mxu0 0
        %544 = vmatpush1.bf16.msra.mxu0 0
        %545 = vmatprep.subr.bf16.mxu0 0
        %546 = vmatpush1.bf16.msra.mxu0 0
        %547 = vmatprep.subr.bf16.mxu0 0
        %548 = vmatpush1.bf16.msra.mxu0 0
        %549 = vmatprep.subr.bf16.mxu0 0
        %550 = vmatpush1.bf16.msra.mxu0 0
        %551 = vmatprep.subr.bf16.mxu0 0
        %552 = vmatpush1.bf16.msra.mxu0 0
        %553 = vmatprep.subr.bf16.mxu0 0
        %554 = vmatpush1.bf16.msra.mxu0 %v539
        %555 = vmatprep.subr.bf16.mxu0 0
        %556 = vmatpush1.bf16.msra.mxu0 %v444
        %557 = vmatprep.subr.bf16.mxu0 0
        %558 = vmatpush2.bf16.msra.mxu0 0
        %559 = vmatprep.subr.bf16.mxu0 0
        %560 = vmatpush2.bf16.msra.mxu0 0
        %561 = vmatprep.subr.bf16.mxu0 0
        %562 = vmatpush2.bf16.msra.mxu0 0
        %563 = vmatprep.subr.bf16.mxu0 0
        %564 = vmatpush2.bf16.msra.mxu0 0
        %565 = vmatprep.subr.bf16.mxu0 0
        %566 = vmatpush2.bf16.msra.mxu0 0
        %567 = vmatprep.subr.bf16.mxu0 0
        %568 = vmatpush2.bf16.msra.mxu0 0
        %569 = vmatprep.subr.bf16.mxu0 0
        %570 = vmatpush2.bf16.msra.mxu0 0
        %571 = vmatprep.subr.bf16.mxu0 0
        %572 = vmatpush2.bf16.msra.mxu0 0
        %573 = vmatprep.mubr.bf16.mxu0 0
        %574 = vmatmul.mubr.bf16.gmra.mxu0 %v536
        %v575 = vpop.f32.mrf.mxu0
        %v576 = vadd.f32 0.0, %v575
        %v577 = vpop.f32.mrf.mxu0
        %v578 = vpop.f32.mrf.mxu0
        %v579 = vpop.f32.mrf.mxu0
        %580 = vdwg.mxu0
        %581 = vset.pattern.permute.xlu0 4
        %582 = vperm.xlu0 %581, %v454
        %v583 = vpop.permute.xlu0 %582
        %v585 = vmul.f32 %v576, %v583
        %586 = vset.pattern.permute.xlu0 5
        %587 = vperm.xlu0 %586, %v454
        %v588 = vpop.permute.xlu0 %587
        %v590 = vadd.f32 %v585, %v588
        %v591 = vmax.f32 %v590, 0.0
        %592 = vset.pattern.permute.xlu0 6
        %593 = vperm.xlu0 %592, %v454
        %v594 = vpop.permute.xlu0 %593
        %v596 = vmul.f32 %v591, %v594
        %597 = vset.pattern.permute.xlu0 7
        %598 = vperm.xlu0 %597, %v454
        %v599 = vpop.permute.xlu0 %598
        %v601 = vadd.f32 %v596, %v599
        %v602 = vmax.f32 %v601, 0.0
        %p603 = scmp.eq.s32.totalorder %s30, 0
        // Predicated region
        $region61: #{tpu_custom_call.1} parent=59 // pred_check
          %p604 = pneg %p603
        $region62: #{tpu_custom_call.1} parent=59 // pred_check_branch
          %606 = sbr.rel (%p604) target = $region64
        $region63: #{tpu_custom_call.1} parent=59 // pred_region
          %p607 = scmp.eq.s32.totalorder %s31, 0
          // Predicated region
          $region65: #{tpu_custom_call.1} parent=63 // pred_check
            %p608 = pneg %p607
          $region66: #{tpu_custom_call.1} parent=63 // pred_check_branch
            %610 = sbr.rel (%p608) target = $region68
          $region67: #{tpu_custom_call.1} parent=63 // pred_region
            %vm611 = vcmask 7168
            %612 = vst.msk [vmem:[#allocation2] sm:$0xff] %vm611, 0.0
          $region68: #{tpu_custom_call.1} parent=63 // pred_fallthru
            _
          %s613 = smul.u32 %s31, 128
          %v614 = vlaneseq
          %v615 = vand.u32 %v614, 127
          %v616 = vstv %s613
          %v617 = vadd.s32 %v616, %v615
          %vm618 = vcmp.lt.s32.totalorder %v617, 16
          %v619 = vadd.f32 %v532, %v602
          %v620 = vsel %vm618, %v619, 0.0
          %v621 = vld [vmem:[#allocation2] sm:$0xff]
          %622 = vadd.xlane.f32.xlu0 %v620
          %v623 = vpop.xlane.xlu0 %622
          %v624 = vadd.f32 %v621, %v623
          %vm625 = vcmask 7168
          %626 = vst.msk [vmem:[#allocation2] sm:$0xff] %vm625, %v624
        $region64: #{tpu_custom_call.1} parent=59 // pred_fallthru
          _
        %p627 = scmp.eq.s32.totalorder %s30, 1
        %p628 = scmp.eq.s32.totalorder %s31, 0
        %p629 = pnand %p627, %p628
        %p630 = pneg %p629
        // Predicated region
        $region69: #{tpu_custom_call.1} parent=59 // pred_check
          _
        $region70: #{tpu_custom_call.1} parent=59 // pred_check_branch
          %632 = sbr.rel (%p629) target = $region72
        $region71: #{tpu_custom_call.1} parent=59 // pred_region
          %v633 = vld [vmem:[#allocation2] sm:$0xff]
          %v634 = vmul.f32 %v633, 0.0625
          %v635 = vld [vmem:[%s4] sm:$0xff]
          %v636 = vld [vmem:[%s4 + $0x8] sm:$0xff]
          %v637 = vld [vmem:[%s4 + $0x10] sm:$0xff]
          %v638 = vld [vmem:[%s4 + $0x18] sm:$0xff]
          %v639 = vld [vmem:[%s4 + $0x20] sm:$0xff]
          %v640 = vld [vmem:[%s4 + $0x28] sm:$0xff]
          %v641 = vld [vmem:[%s4 + $0x30] sm:$0x3]
          %vm642 = vcmask 64512
          %v644 = vsel %vm642, %v635, 0
          %v647 = vsel %vm642, %v636, 0
          %v650 = vsel %vm642, %v637, 0
          %v653 = vsel %vm642, %v638, 0
          %v656 = vsel %vm642, %v639, 0
          %v659 = vsel %vm642, %v640, 0
          %v662 = vsel %vm642, %v641, 0
          %664 = vmatprep.subr.mxu0 0.0
          %665 = vmatpush1.msra.mxu0 0.0
          %666 = vmatprep.subr.mxu0 0.0
          %667 = vmatpush1.msra.mxu0 0.0
          %668 = vmatprep.subr.mxu0 0.0
          %669 = vmatpush1.msra.mxu0 0.0
          %670 = vmatprep.subr.mxu0 0.0
          %671 = vmatpush1.msra.mxu0 0.0
          %672 = vmatprep.subr.mxu0 0.0
          %673 = vmatpush1.msra.mxu0 0.0
          %674 = vmatprep.subr.mxu0 0.0
          %675 = vmatpush1.msra.mxu0 0.0
          %676 = vmatprep.subr.mxu0 0.0
          %677 = vmatpush1.msra.mxu0 0.0
          %678 = vmatprep.subr.mxu0 0.0
          %679 = vmatpush1.msra.mxu0 0.0
          %680 = vmatprep.subr.mxu0 0.0
          %681 = vmatpush1.msra.mxu0 0.0
          %682 = vmatprep.subr.mxu0 0.0
          %683 = vmatpush1.msra.mxu0 0.0
          %684 = vmatprep.subr.mxu0 0.0
          %685 = vmatpush1.msra.mxu0 0.0
          %686 = vmatprep.subr.mxu0 0.0
          %687 = vmatpush1.msra.mxu0 0.0
          %688 = vmatprep.subr.mxu0 0.0
          %689 = vmatpush1.msra.mxu0 0.0
          %690 = vmatprep.subr.mxu0 0.0
          %691 = vmatpush1.msra.mxu0 0.0
          %692 = vmatprep.subr.mxu0 0.0
          %693 = vmatpush1.msra.mxu0 0.0
          %694 = vmatprep.subr.mxu0 0.0
          %695 = vmatpush1.msra.mxu0 %v634
          %696 = vmatprep.subr.mxu0 0.0
          %697 = vmatpush2.msra.mxu0 0.0
          %698 = vmatprep.subr.mxu0 0.0
          %699 = vmatpush2.msra.mxu0 0.0
          %700 = vmatprep.subr.mxu0 0.0
          %701 = vmatpush2.msra.mxu0 0.0
          %702 = vmatprep.subr.mxu0 0.0
          %703 = vmatpush2.msra.mxu0 0.0
          %704 = vmatprep.subr.mxu0 0.0
          %705 = vmatpush2.msra.mxu0 0.0
          %706 = vmatprep.subr.mxu0 0.0
          %707 = vmatpush2.msra.mxu0 0.0
          %708 = vmatprep.subr.mxu0 0.0
          %709 = vmatpush2.msra.mxu0 0.0
          %710 = vmatprep.subr.mxu0 0.0
          %711 = vmatpush2.msra.mxu0 0.0
          %712 = vmatprep.subr.mxu0 0.0
          %713 = vmatpush2.msra.mxu0 0.0
          %714 = vmatprep.subr.mxu0 0.0
          %715 = vmatpush2.msra.mxu0 0.0
          %716 = vmatprep.subr.mxu0 0.0
          %717 = vmatpush2.msra.mxu0 0.0
          %718 = vmatprep.subr.mxu0 0.0
          %719 = vmatpush2.msra.mxu0 0.0
          %720 = vmatprep.subr.mxu0 0.0
          %721 = vmatpush2.msra.mxu0 0.0
          %722 = vmatprep.subr.mxu0 0.0
          %723 = vmatpush2.msra.mxu0 0.0
          %724 = vmatprep.subr.mxu0 0.0
          %725 = vmatpush2.msra.mxu0 0.0
          %726 = vmatprep.subr.mxu0 0.0
          %727 = vmatpush2.msra.mxu0 0.0
          %728 = vmatprep.mubr.f32.mxu0 0.0
          %729 = vmatmul.mubr.f32.gmra.mxu0 %v644
          %v730 = vpop.f32.mrf.mxu0
          %v731 = vadd.f32 0.0, %v730
          %v732 = vpop.f32.mrf.mxu0
          %733 = vmatprep.mubr.f32.mxu0 0.0
          %734 = vmatmul.mubr.f32.gmra.mxu0 %v647
          %v735 = vpop.f32.mrf.mxu0
          %v736 = vadd.f32 0.0, %v735
          %v737 = vpop.f32.mrf.mxu0
          %738 = vmatprep.mubr.f32.mxu0 0.0
          %739 = vmatmul.mubr.f32.gmra.mxu0 %v650
          %v740 = vpop.f32.mrf.mxu0
          %v741 = vadd.f32 0.0, %v740
          %v742 = vpop.f32.mrf.mxu0
          %743 = vmatprep.mubr.f32.mxu0 0.0
          %744 = vmatmul.mubr.f32.gmra.mxu0 %v653
          %v745 = vpop.f32.mrf.mxu0
          %v746 = vadd.f32 0.0, %v745
          %v747 = vpop.f32.mrf.mxu0
          %748 = vmatprep.mubr.f32.mxu0 0.0
          %749 = vmatmul.mubr.f32.gmra.mxu0 %v656
          %v750 = vpop.f32.mrf.mxu0
          %v751 = vadd.f32 0.0, %v750
          %v752 = vpop.f32.mrf.mxu0
          %753 = vmatprep.mubr.f32.mxu0 0.0
          %754 = vmatmul.mubr.f32.gmra.mxu0 %v659
          %v755 = vpop.f32.mrf.mxu0
          %v756 = vadd.f32 0.0, %v755
          %v757 = vpop.f32.mrf.mxu0
          %758 = vmatprep.mubr.f32.mxu0 0.0
          %759 = vmatmul.mubr.f32.gmra.mxu0 %v662
          %v760 = vpop.f32.mrf.mxu0
          %v761 = vadd.f32 0.0, %v760
          %v762 = vpop.f32.mrf.mxu0
          %763 = vdwg.mxu0
          %v764 = vld [vmem:[%s5] sm:$0xff]
          %v765 = vld [vmem:[%s5 + $0x8] sm:$0xff]
          %v766 = vld [vmem:[%s5 + $0x10] sm:$0xff]
          %v767 = vld [vmem:[%s5 + $0x18] sm:$0xff]
          %v768 = vld [vmem:[%s5 + $0x20] sm:$0xff]
          %v769 = vld [vmem:[%s5 + $0x28] sm:$0xff]
          %v770 = vld [vmem:[%s5 + $0x30] sm:$0x3]
          %v771 = vmul.f32 %v731, %v764
          %v772 = vmul.f32 %v736, %v765
          %v773 = vmul.f32 %v741, %v766
          %v774 = vmul.f32 %v746, %v767
          %v775 = vmul.f32 %v751, %v768
          %v776 = vmul.f32 %v756, %v769
          %v777 = vmul.f32 %v761, %v770
          %785 = vrot.lane.b32.xlu0 %v764, 127
          %v786 = vpop.permute.xlu0 %785
          %787 = vrot.lane.b32.xlu0 %v765, 127
          %v788 = vpop.permute.xlu0 %787
          %789 = vrot.lane.b32.xlu0 %v766, 127
          %v790 = vpop.permute.xlu0 %789
          %791 = vrot.lane.b32.xlu0 %v767, 127
          %v792 = vpop.permute.xlu0 %791
          %793 = vrot.lane.b32.xlu0 %v768, 127
          %v794 = vpop.permute.xlu0 %793
          %795 = vrot.lane.b32.xlu0 %v769, 127
          %v796 = vpop.permute.xlu0 %795
          %797 = vrot.lane.b32.xlu0 %v770, 127
          %v798 = vpop.permute.xlu0 %797
          %v806 = vadd.f32 %v771, %v786
          %v807 = vadd.f32 %v772, %v788
          %v808 = vadd.f32 %v773, %v790
          %v809 = vadd.f32 %v774, %v792
          %v810 = vadd.f32 %v775, %v794
          %v811 = vadd.f32 %v776, %v796
          %v812 = vadd.f32 %v777, %v798
          %v813 = vmax.f32 %v806, 0.0
          %v814 = vmax.f32 %v807, 0.0
          %v815 = vmax.f32 %v808, 0.0
          %v816 = vmax.f32 %v809, 0.0
          %v817 = vmax.f32 %v810, 0.0
          %v818 = vmax.f32 %v811, 0.0
          %v819 = vmax.f32 %v812, 0.0
          %v820 = vld [vmem:[%s6] sm:$0xff]
          %vm821 = vcmask 408576
          %v823 = vsel %vm821, %v820, 0
          %v826 = vsel %vm435, %v819, 0
          %828 = vmatprep.subr.mxu0 0.0
          %829 = vmatpush1.msra.mxu0 0.0
          %830 = vmatprep.subr.mxu0 0.0
          %831 = vmatpush1.msra.mxu0 0.0
          %832 = vmatprep.subr.mxu0 0.0
          %833 = vmatpush1.msra.mxu0 0.0
          %834 = vmatprep.subr.mxu0 0.0
          %835 = vmatpush1.msra.mxu0 0.0
          %836 = vmatprep.subr.mxu0 0.0
          %837 = vmatpush1.msra.mxu0 0.0
          %838 = vmatprep.subr.mxu0 0.0
          %839 = vmatpush1.msra.mxu0 0.0
          %840 = vmatprep.subr.mxu0 0.0
          %841 = vmatpush1.msra.mxu0 0.0
          %842 = vmatprep.subr.mxu0 0.0
          %843 = vmatpush1.msra.mxu0 0.0
          %844 = vmatprep.subr.mxu0 0.0
          %845 = vmatpush1.msra.mxu0 0.0
          %846 = vmatprep.subr.mxu0 0.0
          %847 = vmatpush1.msra.mxu0 %v826
          %848 = vmatprep.subr.mxu0 0.0
          %849 = vmatpush1.msra.mxu0 %v818
          %850 = vmatprep.subr.mxu0 0.0
          %851 = vmatpush1.msra.mxu0 %v817
          %852 = vmatprep.subr.mxu0 0.0
          %853 = vmatpush1.msra.mxu0 %v816
          %854 = vmatprep.subr.mxu0 0.0
          %855 = vmatpush1.msra.mxu0 %v815
          %856 = vmatprep.subr.mxu0 0.0
          %857 = vmatpush1.msra.mxu0 %v814
          %858 = vmatprep.subr.mxu0 0.0
          %859 = vmatpush1.msra.mxu0 %v813
          %860 = vmatprep.subr.mxu0 0.0
          %861 = vmatpush2.msra.mxu0 0.0
          %862 = vmatprep.subr.mxu0 0.0
          %863 = vmatpush2.msra.mxu0 0.0
          %864 = vmatprep.subr.mxu0 0.0
          %865 = vmatpush2.msra.mxu0 0.0
          %866 = vmatprep.subr.mxu0 0.0
          %867 = vmatpush2.msra.mxu0 0.0
          %868 = vmatprep.subr.mxu0 0.0
          %869 = vmatpush2.msra.mxu0 0.0
          %870 = vmatprep.subr.mxu0 0.0
          %871 = vmatpush2.msra.mxu0 0.0
          %872 = vmatprep.subr.mxu0 0.0
          %873 = vmatpush2.msra.mxu0 0.0
          %874 = vmatprep.subr.mxu0 0.0
          %875 = vmatpush2.msra.mxu0 0.0
          %876 = vmatprep.subr.mxu0 0.0
          %877 = vmatpush2.msra.mxu0 0.0
          %878 = vmatprep.subr.mxu0 0.0
          %879 = vmatpush2.msra.mxu0 0.0
          %880 = vmatprep.subr.mxu0 0.0
          %881 = vmatpush2.msra.mxu0 0.0
          %882 = vmatprep.subr.mxu0 0.0
          %883 = vmatpush2.msra.mxu0 0.0
          %884 = vmatprep.subr.mxu0 0.0
          %885 = vmatpush2.msra.mxu0 0.0
          %886 = vmatprep.subr.mxu0 0.0
          %887 = vmatpush2.msra.mxu0 0.0
          %888 = vmatprep.subr.mxu0 0.0
          %889 = vmatpush2.msra.mxu0 0.0
          %890 = vmatprep.subr.mxu0 0.0
          %891 = vmatpush2.msra.mxu0 0.0
          %892 = vmatprep.mubr.f32.mxu0 0.0
          %893 = vmatmul.mubr.f32.gmra.mxu0 %v823
          %v894 = vpop.f32.mrf.mxu0
          %v895 = vadd.f32 0.0, %v894
          %v896 = vpop.f32.mrf.mxu0
          %897 = vdwg.mxu0
          %v898 = vld [vmem:[%s7] sm:$0xff]
          %v899 = vmul.f32 %v895, %v898
          %901 = vrot.lane.b32.xlu0 %v898, 127
          %v902 = vpop.permute.xlu0 %901
          %v904 = vadd.f32 %v899, %v902
          %v905 = vmax.f32 %v904, 0.0
          %v906 = vld [vmem:[%s8] sm:$0xff]
          %v907 = vld [vmem:[%s8 + $0x8] sm:$0xff]
          %v909 = vsel %vm642, %v906, 0
          %v912 = vsel %vm642, %v907, 0
          %914 = vmatprep.subr.mxu0 0.0
          %915 = vmatpush1.msra.mxu0 0.0
          %916 = vmatprep.subr.mxu0 0.0
          %917 = vmatpush1.msra.mxu0 0.0
          %918 = vmatprep.subr.mxu0 0.0
          %919 = vmatpush1.msra.mxu0 0.0
          %920 = vmatprep.subr.mxu0 0.0
          %921 = vmatpush1.msra.mxu0 0.0
          %922 = vmatprep.subr.mxu0 0.0
          %923 = vmatpush1.msra.mxu0 0.0
          %924 = vmatprep.subr.mxu0 0.0
          %925 = vmatpush1.msra.mxu0 0.0
          %926 = vmatprep.subr.mxu0 0.0
          %927 = vmatpush1.msra.mxu0 0.0
          %928 = vmatprep.subr.mxu0 0.0
          %929 = vmatpush1.msra.mxu0 0.0
          %930 = vmatprep.subr.mxu0 0.0
          %931 = vmatpush1.msra.mxu0 0.0
          %932 = vmatprep.subr.mxu0 0.0
          %933 = vmatpush1.msra.mxu0 0.0
          %934 = vmatprep.subr.mxu0 0.0
          %935 = vmatpush1.msra.mxu0 0.0
          %936 = vmatprep.subr.mxu0 0.0
          %937 = vmatpush1.msra.mxu0 0.0
          %938 = vmatprep.subr.mxu0 0.0
          %939 = vmatpush1.msra.mxu0 0.0
          %940 = vmatprep.subr.mxu0 0.0
          %941 = vmatpush1.msra.mxu0 0.0
          %942 = vmatprep.subr.mxu0 0.0
          %943 = vmatpush1.msra.mxu0 0.0
          %944 = vmatprep.subr.mxu0 0.0
          %945 = vmatpush1.msra.mxu0 %v905
          %946 = vmatprep.subr.mxu0 0.0
          %947 = vmatpush2.msra.mxu0 0.0
          %948 = vmatprep.subr.mxu0 0.0
          %949 = vmatpush2.msra.mxu0 0.0
          %950 = vmatprep.subr.mxu0 0.0
          %951 = vmatpush2.msra.mxu0 0.0
          %952 = vmatprep.subr.mxu0 0.0
          %953 = vmatpush2.msra.mxu0 0.0
          %954 = vmatprep.subr.mxu0 0.0
          %955 = vmatpush2.msra.mxu0 0.0
          %956 = vmatprep.subr.mxu0 0.0
          %957 = vmatpush2.msra.mxu0 0.0
          %958 = vmatprep.subr.mxu0 0.0
          %959 = vmatpush2.msra.mxu0 0.0
          %960 = vmatprep.subr.mxu0 0.0
          %961 = vmatpush2.msra.mxu0 0.0
          %962 = vmatprep.subr.mxu0 0.0
          %963 = vmatpush2.msra.mxu0 0.0
          %964 = vmatprep.subr.mxu0 0.0
          %965 = vmatpush2.msra.mxu0 0.0
          %966 = vmatprep.subr.mxu0 0.0
          %967 = vmatpush2.msra.mxu0 0.0
          %968 = vmatprep.subr.mxu0 0.0
          %969 = vmatpush2.msra.mxu0 0.0
          %970 = vmatprep.subr.mxu0 0.0
          %971 = vmatpush2.msra.mxu0 0.0
          %972 = vmatprep.subr.mxu0 0.0
          %973 = vmatpush2.msra.mxu0 0.0
          %974 = vmatprep.subr.mxu0 0.0
          %975 = vmatpush2.msra.mxu0 0.0
          %976 = vmatprep.subr.mxu0 0.0
          %977 = vmatpush2.msra.mxu0 0.0
          %978 = vmatprep.mubr.f32.mxu0 0.0
          %979 = vmatmul.mubr.f32.gmra.mxu0 %v909
          %v980 = vpop.f32.mrf.mxu0
          %v981 = vadd.f32 0.0, %v980
          %v982 = vpop.f32.mrf.mxu0
          %983 = vmatprep.mubr.f32.mxu0 0.0
          %984 = vmatmul.mubr.f32.gmra.mxu0 %v912
          %v985 = vpop.f32.mrf.mxu0
          %v986 = vadd.f32 0.0, %v985
          %v987 = vpop.f32.mrf.mxu0
          %988 = vdwg.mxu0
          %v989 = vld [vmem:[%s9] sm:$0xff]
          %v990 = vld [vmem:[%s9 + $0x8] sm:$0xff]
          %v991 = vmul.f32 %v981, %v989
          %v992 = vmul.f32 %v986, %v990
          %995 = vrot.lane.b32.xlu0 %v989, 127
          %v996 = vpop.permute.xlu0 %995
          %997 = vrot.lane.b32.xlu0 %v990, 127
          %v998 = vpop.permute.xlu0 %997
          %v1001 = vadd.f32 %v991, %v996
          %v1002 = vadd.f32 %v992, %v998
          %v1003 = vmax.f32 %v1001, 0.0
          %v1004 = vmax.f32 %v1002, 0.0
          %v1005 = vsub.f32 %v1003, %v1004
          %v1006 = vmul.f32 %v1005, 0.5
          %v1007 = vtanh.pop %v1006
          %v1008 = vadd.f32 %v1007, 1.0
          %v1009 = vmul.f32 %v1008, 0.5
          %vm1010 = vcmask 7168
          %1011 = vst.msk [vmem:[#allocation3] sm:$0xff] %vm1010, %v1009
        $region72: #{tpu_custom_call.1} parent=59 // pred_fallthru
          _
        // Predicated region
        $region73: #{tpu_custom_call.1} parent=59 // pred_check
          %p1012 = pneg %p627
        $region74: #{tpu_custom_call.1} parent=59 // pred_check_branch
          %1014 = sbr.rel (%p1012) target = $region76
        $region75: #{tpu_custom_call.1} parent=59 // pred_region
          %v1015 = vld [vmem:[#allocation3] sm:$0xff]
          %v1016 = vsub.f32 %v532, %v602
          %1018 = vset.pattern.permute.xlu0 0
          %1019 = vperm.xlu0 %1018, %v1015
          %v1020 = vpop.permute.xlu0 %1019
          %v1022 = vmul.f32 %v1020, %v1016
          %v1023 = vadd.f32 %v602, %v1022
          %v1024 = vpack.c.bf16 %v1023, %v1023
          %1025 = vst [vmem:[%s380] sm:$0xf] %v1024
        $region76: #{tpu_custom_call.1} parent=59 // pred_fallthru
          _
        %s1026 = sand.u32 %s272, 1
        %s1027 = scalar_lea.sflag [#allocation5], %s1026
        %s1028 = sand.u32 %s272, 1
        %s1029 = smul.addr %s1028, 4
        %s1030 = scalar_lea.vmem [#allocation4], %s1029
        // Predicated region
        $region77: #{tpu_custom_call.1} parent=59 // pred_check
          %p1031 = pneg %p282
        $region78: #{tpu_custom_call.1} parent=59 // pred_check_branch
          %1033 = sbr.rel (%p1031) target = $region80
        $region79: #{tpu_custom_call.1} parent=59 // pred_region
          %s1034 = smul.u32 %s30, %s31
          %s1036 = ssub.s32 64, 64
          %1037 = vsyncadd %s1027, %s1036
          %s1038 = sadd.s32 %s1034, %s29
          %s1039 = smul.addr %s1038, 64
          %s1040 = scalar_lea.hbm %s10, %s1039
          %s1042 = sshll.u32 %s1030, 4
          %s1043 = int_to_ptr.vmem [resolvable:$true] %s1042
          %1045 = dma.vmem_to_hbm [thread:$0]  %s1043, 64, %s1040, %s1027
        $region80: #{tpu_custom_call.1} parent=59 // pred_fallthru
          _
      $region60: #{tpu_custom_call.1} parent=5 // pred_fallthru
        _
      %p1046 = scmp.le.s32.totalorder 2, %s19
      // Predicated region
      $region81: #{tpu_custom_call.1} parent=5 // pred_check
        %p1047 = pneg %p1046
      $region82: #{tpu_custom_call.1} parent=5 // pred_check_branch
        %1049 = sbr.rel (%p1047) target = $region84
      $region83: #{tpu_custom_call.1} parent=5 // pred_region
        %s1050 = ssub.s32 %s19, 2
        // Predicated region
        $region85: #{tpu_custom_call.1} parent=83 // pred_check
          %p1051 = pneg %p288
        $region86: #{tpu_custom_call.1} parent=83 // pred_check_branch
          %1053 = sbr.rel (%p1051) target = $region88
        $region87: #{tpu_custom_call.1} parent=83 // pred_region
          %s1054 = sand.u32 %s273, 1
          %s1055 = scalar_lea.sflag [#allocation5], %s1054
          %s1056 = sand.u32 %s273, 1
          %s1057 = smul.addr %s1056, 4
          %s1058 = scalar_lea.vmem [#allocation4], %s1057
          %1059 = dma.done %s1055, 64
        $region88: #{tpu_custom_call.1} parent=83 // pred_fallthru
          _
      $region84: #{tpu_custom_call.1} parent=5 // pred_fallthru
        _
    $region6: #{tpu_custom_call.1} parent=1 // loop_footer
      %s23 = sadd.s32 1, %s19
    $region7: #{tpu_custom_call.1} parent=1 // loop_footer_branch
      %18 = sbr.rel target = $region3
    $region8: #{tpu_custom_call.1} parent=1 // loop_exit
      _
    %1060 = vsyncpa [#allocation5], 1
    %s1061 = scalar_lea.sflag [#allocation5], 1
    %1062 = vsyncpa %s1061, 1

</llo_original>
